<compile_context>
chip_gen: v7x
topology: tpu7x:2x2x1
jax: 0.10.0
libtpu: 0.0.40
codegen_flags: <defaults>
</compile_context>

<pallas_src>
import functools

import numpy as np
import jax
import jax.numpy as jnp
from jax.experimental import pallas as pl
from jax.experimental.pallas import tpu as pltpu


# ----------------------------------------------------------------------------
# Kernel 1: spectral scale (sigma via power iteration) + weight normalization
# ----------------------------------------------------------------------------
def _spectral_scale_kernel(w_ref, wn_ref, *, ln_lambda, iters):
    """w_ref:  (Cout, K) flattened weight (a column permutation of
               weight_bar.view(Cout, -1); singular values are permutation
               invariant, so sigma is identical to the PyTorch module's).
       wn_ref: (Cout, K) spectrally normalized weight w / max(1, sigma/ln_lambda).
    """
    hi = jax.lax.Precision.HIGHEST
    w = w_ref[...].astype(jnp.float32)                          # (Cout, K)

    # Gram matrix G = W W^T  (contract axis 1 of both; avoids an explicit .T)
    g = jax.lax.dot_general(w, w, dimension_numbers=(((1,), (1,)), ((), ())),
                            preferred_element_type=jnp.float32,
                            precision=hi)                       # (Cout, Cout)

    v0 = jnp.ones((g.shape[0], 1), jnp.float32)

    def body(_, v):
        u = jnp.dot(g, v, preferred_element_type=jnp.float32, precision=hi)
        return u * jax.lax.rsqrt(jnp.sum(u * u) + 1e-30)

    v = jax.lax.fori_loop(0, iters, body, v0)                   # unit top eigvec
    gv = jnp.dot(g, v, preferred_element_type=jnp.float32, precision=hi)
    lam = jnp.sum(v * gv)                                       # Rayleigh quotient
    sigma = jnp.sqrt(jnp.maximum(lam, 0.0))                     # sigma_max(W)
    sigma_eff = jnp.maximum(jnp.float32(1.0), sigma / jnp.float32(ln_lambda))
    wn_ref[...] = (w * (1.0 / sigma_eff)).astype(wn_ref.dtype)


# ----------------------------------------------------------------------------
# Kernel 2: wrapped Conv2d(k=3, s=1, p=1) forward with the normalized weight
# ----------------------------------------------------------------------------
def _shift_lanes(x, delta, n):
    """y[..., p] = x[..., (p + delta) mod n]; wrapped entries are masked by caller."""
    d = delta % n
    if d == 0:
        return x
    return jnp.concatenate([x[..., d:], x[..., :d]], axis=-1)


def _sn_conv_kernel(w_ref, b_ref, x_ref, o_ref, *, H, W, Cin, Cout):
    """w_ref: (Cout, 9*Cin)   normalized weight, column order tap-major / channel-minor
       b_ref: (Cout, 1)       bias (unnormalized, as in the module)
       x_ref: (T, Cin, H*W)   lane-dense input block
       o_ref: (T, Cout, H*W)  lane-dense output block
    """
    HW = H * W
    T = x_ref.shape[0]
    wn = w_ref[...]                                              # (Cout, 9*Cin)
    bias = jnp.broadcast_to(b_ref[...], (Cout, HW))              # hoisted

    # Hoisted per-lane (y, x) coordinates and per-tap validity masks.
    pos = jax.lax.broadcasted_iota(jnp.int32, (Cin, HW), 1)
    yc = pos // W
    xc = pos - yc * W
    taps = [(dy, dx) for dy in (-1, 0, 1) for dx in (-1, 0, 1)]  # k = ky*3 + kx
    masks = [((yc + dy) >= 0) & ((yc + dy) < H) &
             ((xc + dx) >= 0) & ((xc + dx) < W) for (dy, dx) in taps]

    def one_image(t):
        xt = x_ref[t]                                            # (Cin, HW)
        pieces = []
        for k, (dy, dx) in enumerate(taps):
            shifted = _shift_lanes(xt, dy * W + dx, HW)
            pieces.append(jnp.where(masks[k], shifted, 0.0))
        xstack = jnp.concatenate(pieces, axis=0)                 # (9*Cin, HW)
        yt = jnp.dot(wn, xstack, preferred_element_type=jnp.float32,
                     precision=jax.lax.Precision.HIGHEST)        # (Cout, HW)
        o_ref[t] = (yt + bias).astype(o_ref.dtype)

    if T == 1:
        one_image(0)
    else:
        def body(t, carry):
            one_image(t)
            return carry
        jax.lax.fori_loop(0, T, body, 0, unroll=(T <= 8))


# ----------------------------------------------------------------------------
# Tiling + wrapper
# ----------------------------------------------------------------------------
def _pick_tile_n(n, cin, cout, hw, dtype_bytes=4,
                 budget_bytes=12 * 1024 * 1024, min_grid_steps=8):
    """Images per grid step, sized from the PADDED (8,128)-tiled footprint of the
    double-buffered in+out blocks, capped so the grid keeps >= min_grid_steps
    steps when possible (>= 4 per v7x TensorCore with a 'parallel' axis)."""
    pad8 = lambda v: -(-v // 8) * 8
    pad128 = lambda v: -(-v // 128) * 128
    per_image = (pad8(cin) + pad8(cout)) * pad128(hw) * dtype_bytes
    per_image *= 2                                   # double-buffered in + out
    cap_vmem = max(1, budget_bytes // max(per_image, 1))
    cap_steps = max(1, -(-n // min_grid_steps))
    return max(1, min(n, cap_vmem, cap_steps))


def spectral_norm_conv2d(x, weight_bar, bias, *, ln_lambda=1.0, power_iters=512):
    """Forward of SpectralNorm(nn.Conv2d(Cin, Cout, 3, stride=1, padding=1), ln_lambda).

    x:          (N, Cin, H, W) float32 NCHW
    weight_bar: (Cout, Cin, 3, 3) raw (un-normalized) conv weight (`weight_bar`)
    bias:       (Cout,) conv bias
    """
    N, Cin, H, W = x.shape
    Cout, Cin2, KH, KW = weight_bar.shape
    assert Cin2 == Cin and KH == 3 and KW == 3, "wrapped module is Conv2d(k=3, s=1, p=1)"
    HW = H * W

    # Flattened weight, tap-major / channel-minor columns (a permutation of
    # weight_bar.view(Cout, -1) -> identical singular values).
    w_perm = jnp.transpose(weight_bar, (0, 2, 3, 1)).reshape(Cout, KH * KW * Cin)
    w_perm = w_perm.astype(jnp.float32)

    # ---- kernel 1: sigma + weight normalization (single step, whole weight in VMEM)
    wn = pl.pallas_call(
        functools.partial(_spectral_scale_kernel,
                          ln_lambda=float(ln_lambda), iters=int(power_iters)),
        out_shape=jax.ShapeDtypeStruct(w_perm.shape, jnp.float32),
        grid=(1,),
        in_specs=[pl.BlockSpec(w_perm.shape, lambda i: (0, 0))],
        out_specs=pl.BlockSpec(w_perm.shape, lambda i: (0, 0)),
    )(w_perm)

    # ---- kernel 2: the wrapped Conv2d forward (lane-dense streaming over images)
    x3 = x.reshape(N, Cin, HW).astype(jnp.float32)               # metadata-only
    b2 = bias.reshape(Cout, 1).astype(jnp.float32)

    tile_n = _pick_tile_n(N, Cin, Cout, HW)
    grid_n = pl.cdiv(N, tile_n)

    y = pl.pallas_call(
        functools.partial(_sn_conv_kernel, H=H, W=W, Cin=Cin, Cout=Cout),
        out_shape=jax.ShapeDtypeStruct((N, Cout, HW), jnp.float32),
        grid=(grid_n,),
        in_specs=[
            pl.BlockSpec((Cout, KH * KW * Cin), lambda i: (0, 0)),  # normalized weight
            pl.BlockSpec((Cout, 1), lambda i: (0, 0)),              # bias
            pl.BlockSpec((tile_n, Cin, HW), lambda i: (i, 0, 0)),   # input images
        ],
        out_specs=pl.BlockSpec((tile_n, Cout, HW), lambda i: (i, 0, 0)),
        compiler_params=pltpu.CompilerParams(
            dimension_semantics=("parallel",),
            vmem_limit_bytes=32 * 1024 * 1024,
        ),
    )(wn, b2, x3)

    return y.reshape(N, Cout, H, W)                              # metadata-only


# ----------------------------------------------------------------------------
# Pure-JAX / numpy reference (matches the PyTorch module semantics exactly)
# ----------------------------------------------------------------------------
def _reference_spectral_norm_conv2d(x, weight_bar, bias, ln_lambda=1.0):
    Cout = weight_bar.shape[0]
    w2 = np.asarray(weight_bar).reshape(Cout, -1)
    sigma = float(np.linalg.svd(w2, compute_uv=False)[0])   # == torch.svd(...)[1][0]
    sigma_eff = max(1.0, sigma / float(ln_lambda))
    w_n = weight_bar / jnp.float32(sigma_eff)
    y = jax.lax.conv_general_dilated(
        x, w_n, window_strides=(1, 1), padding=((1, 1), (1, 1)),
        dimension_numbers=("NCHW", "OIHW", "NCHW"),
        precision=jax.lax.Precision.HIGHEST)
    return y + bias.reshape(1, Cout, 1, 1)


if __name__ == "__main__":
    key = jax.random.PRNGKey(0)
    k_x, k_w, k_b = jax.random.split(key, 3)

    # SpectralNorm(nn.Conv2d(4, 8, kernel_size=3, stride=1, padding=1), ln_lambda=1.0)
    N, Cin, Cout, H, W = 2, 4, 8, 16, 16
    x = jax.random.normal(k_x, (N, Cin, H, W), dtype=jnp.float32)
    weight_bar = jax.random.normal(k_w, (Cout, Cin, 3, 3), dtype=jnp.float32) * 0.5
    bias = jax.random.normal(k_b, (Cout,), dtype=jnp.float32) * 0.1

    y = jax.block_until_ready(spectral_norm_conv2d(x, weight_bar, bias, ln_lambda=1.0))
    assert y.shape == (N, Cout, H, W) and y.dtype == jnp.float32

    y_ref = jax.block_until_ready(
        _reference_spectral_norm_conv2d(x, weight_bar, bias, ln_lambda=1.0))
    np.testing.assert_allclose(np.asarray(y), np.asarray(y_ref), rtol=1e-4, atol=1e-4)

    print("KERNEL_OK")
</pallas_src>

<mosaic_0001>
module attributes {stable_mosaic.version = 11 : i64} {
  func.func @_spectral_scale_kernel(%arg0: i32, %arg1: memref<8x36xf32, #tpu.memory_space<vmem>>, %arg2: memref<8x36xf32, #tpu.memory_space<vmem>>) attributes {dimension_semantics = [#tpu.dimension_semantics<arbitrary>], iteration_bounds = array<i64: 1>, scalar_prefetch = 0 : i64, scratch_operands = 0 : i64, tpu.core_type = #tpu.core_type<tc>, window_params = [{pipeline_mode = #tpu.pipeline_mode<synchronous>, transform_indices = @transform_0, window_bounds = array<i64: 8, 36>}, {pipeline_mode = #tpu.pipeline_mode<synchronous>, transform_indices = @transform_1, window_bounds = array<i64: 8, 36>}]} {
    %c0 = arith.constant 0 : index
    %c0_0 = arith.constant 0 : index
    %0 = vector.load %arg1[%c0, %c0_0] : memref<8x36xf32, #tpu.memory_space<vmem>>, vector<8x36xf32>
    %cst = arith.constant dense<0.000000e+00> : vector<8x8xf32>
    %1 = tpu.matmul %0, %0, %cst {dimension_numbers = #tpu.dot_dimension_numbers<[1], [1], [0], [0], [0, 0, 1, 0], [], []>, precision = #tpu.contract_precision<fp32>} : vector<8x36xf32>, vector<8x36xf32>, vector<8x8xf32> -> vector<8x8xf32>
    %cst_1 = arith.constant 1.000000e+00 : f32
    %2 = vector.broadcast %cst_1 : f32 to vector<8x1xf32>
    %c0_i32 = arith.constant 0 : i32
    %c512_i32 = arith.constant 512 : i32
    %3 = arith.addi %c0_i32, %c512_i32 : i32
    %c1_i32 = arith.constant 1 : i32
    %4 = scf.for %arg3 = %c0_i32 to %3 step %c1_i32 iter_args(%arg4 = %2) -> (vector<8x1xf32>)  : i32 {
      %cst_10 = arith.constant dense<0.000000e+00> : vector<8x1xf32>
      %19 = tpu.matmul %1, %arg4, %cst_10 {dimension_numbers = #tpu.dot_dimension_numbers<[1], [0], [0], [1], [0, 0, 1, 1], [], []>, precision = #tpu.contract_precision<fp32>} : vector<8x8xf32>, vector<8x1xf32>, vector<8x1xf32> -> vector<8x1xf32>
      %20 = arith.mulf %19, %19 : vector<8x1xf32>
      %21 = vector.shape_cast %20 : vector<8x1xf32> to vector<1x8x1xf32>
      %cst_11 = arith.constant dense<0.000000e+00> : vector<1xf32>
      %22 = vector.multi_reduction <add>, %21, %cst_11 [1, 2] : vector<1x8x1xf32> to vector<1xf32>
      %23 = vector.shape_cast %22 : vector<1xf32> to vector<1x1x1xf32>
      %24 = vector.extract %23[0, 0, 0] : f32 from vector<1x1x1xf32>
      %cst_12 = arith.constant 1.000000e-30 : f32
      %25 = arith.addf %24, %cst_12 : f32
      %26 = math.rsqrt %25 : f32
      %27 = vector.broadcast %26 : f32 to vector<8x1xf32>
      %28 = arith.mulf %19, %27 : vector<8x1xf32>
      scf.yield %28 : vector<8x1xf32>
    }
    %cst_2 = arith.constant dense<0.000000e+00> : vector<8x1xf32>
    %5 = tpu.matmul %1, %4, %cst_2 {dimension_numbers = #tpu.dot_dimension_numbers<[1], [0], [0], [1], [0, 0, 1, 1], [], []>, precision = #tpu.contract_precision<fp32>} : vector<8x8xf32>, vector<8x1xf32>, vector<8x1xf32> -> vector<8x1xf32>
    %6 = arith.mulf %4, %5 : vector<8x1xf32>
    %7 = vector.shape_cast %6 : vector<8x1xf32> to vector<1x8x1xf32>
    %cst_3 = arith.constant dense<0.000000e+00> : vector<1xf32>
    %8 = vector.multi_reduction <add>, %7, %cst_3 [1, 2] : vector<1x8x1xf32> to vector<1xf32>
    %9 = vector.shape_cast %8 : vector<1xf32> to vector<1x1x1xf32>
    %10 = vector.extract %9[0, 0, 0] : f32 from vector<1x1x1xf32>
    %cst_4 = arith.constant 0.000000e+00 : f32
    %11 = arith.maximumf %10, %cst_4 : f32
    %12 = math.sqrt %11 : f32
    %cst_5 = arith.constant 1.000000e+00 : f32
    %13 = arith.divf %12, %cst_5 : f32
    %cst_6 = arith.constant 1.000000e+00 : f32
    %14 = arith.maximumf %cst_6, %13 : f32
    %cst_7 = arith.constant 1.000000e+00 : f32
    %15 = arith.divf %cst_7, %14 : f32
    %16 = vector.broadcast %15 : f32 to vector<8x36xf32>
    %17 = arith.mulf %0, %16 : vector<8x36xf32>
    %c0_8 = arith.constant 0 : index
    %c0_9 = arith.constant 0 : index
    %18 = vector.load %arg2[%c0_8, %c0_9] : memref<8x36xf32, #tpu.memory_space<vmem>>, vector<8x36xf32>
    tpu.vector_store %arg2[%c0_8, %c0_9], %17 {strides = array<i32>} : memref<8x36xf32, #tpu.memory_space<vmem>>, vector<8x36xf32>,
    return
  }
  func.func @transform_0(%arg0: i32) -> (i32, i32) {
    %c0_i32 = arith.constant 0 : i32
    %c0_i32_0 = arith.constant 0 : i32
    %c0_i32_1 = arith.constant 0 : i32
    return %c0_i32, %c0_i32_0 : i32, i32
  }
  func.func @transform_1(%arg0: i32) -> (i32, i32) {
    %c0_i32 = arith.constant 0 : i32
    %c0_i32_0 = arith.constant 0 : i32
    %c0_i32_1 = arith.constant 0 : i32
    return %c0_i32, %c0_i32_0 : i32, i32
  }
}

</mosaic_0001>

<llo_original>
// kernel: tpu_custom_call.1
$region0: #{tpu_custom_call.1}
  #allocation0 [shape = 'u32[]', space=smem, size = 0x4, offset = 0x4, fixed_abs, tag = 'smem constant byte address 0x4 - core index']
  #allocation1 [shape = 'u32[144,128]{1,0:T(1,128)}', space=vmem, size = 0x12000, scoped, tag = 'internal scratch']
  %s0 = inlined_call_operand.hbm [shape: f32[8,36], index: 0, kind: input, shape index: {}]
  %s1 = inlined_call_operand.hbm [shape: f32[8,36], index: 1, kind: output, shape index: {}]
  %s2 = sld [smem:[#allocation0]]
  $region25: #{tpu_custom_call.1} parent=0
    _
  %s4 = ssub.s32 1, %s2
  %s5 = scalar_select 0, %s4, %s2
  $region1: #{tpu_custom_call.1} parent=0
    #allocation2 [shape = 'u8[4096]{0}', space=vmem, size = 0x1000, scoped, tag = 'input window, operand 0, single buffered']
    #allocation3 [shape = 's32[1]{0}', space=sflag, size = 0x4, scoped, tag = 'scoped memory for tpu_custom_call.1']
    #allocation4 [shape = 's32[1]{0}', space=sflag, size = 0x4, scoped, tag = 'scoped memory for tpu_custom_call.1']
    #allocation5 [shape = 'u8[4096]{0}', space=vmem, size = 0x1000, scoped, tag = 'output window, operand 0, single buffered']
    %6 = vsyncpa [#allocation3], 0
    %7 = vsyncpa [#allocation4], 0
    // Predicated region
    $region2: #{tpu_custom_call.1} parent=1 // pred_check
      _
    $region3: #{tpu_custom_call.1} parent=1 // pred_check_branch
      %9 = sbr.rel (0) target = $region5
    $region4: #{tpu_custom_call.1} parent=1 // pred_region
      %s11 = ssub.s32 128, 128
      %12 = vsyncadd [#allocation3], %s11
      %s14 = sshll.u32 [#allocation2], 4
      %s15 = int_to_ptr.vmem [resolvable:$true] %s14
      %17 = dma.hbm_to_vmem [thread:$0]  %s0, 128, %s15, [#allocation3]
    $region5: #{tpu_custom_call.1} parent=1 // pred_fallthru
      _
    // Predicated region
    $region6: #{tpu_custom_call.1} parent=1 // pred_check
      _
    $region7: #{tpu_custom_call.1} parent=1 // pred_check_branch
      %19 = sbr.rel (0) target = $region9
    $region8: #{tpu_custom_call.1} parent=1 // pred_region
      %20 = dma.done [#allocation3], 128
    $region9: #{tpu_custom_call.1} parent=1 // pred_fallthru
      _
    %v21 = vld [vmem:[#allocation2] sm:$0xff]
    %vm22 = vcmask 293888
    %v24 = vsel %vm22, %v21, 0
    %26 = vmatprep.subr.mxu0 0.0
    %v27 = vand.u32 %v24, 4294901760
    %28 = vmatpush1.xpose.msra.mxu0 %v27
    %29 = vmatprep.subr.mxu0 0.0
    %30 = vmatpush1.xpose.msra.mxu0 0.0
    %31 = vmatprep.subr.mxu0 0.0
    %32 = vmatpush1.xpose.msra.mxu0 0.0
    %33 = vmatprep.subr.mxu0 0.0
    %34 = vmatpush1.xpose.msra.mxu0 0.0
    %35 = vmatprep.subr.mxu0 0.0
    %36 = vmatpush1.xpose.msra.mxu0 0.0
    %37 = vmatprep.subr.mxu0 0.0
    %38 = vmatpush1.xpose.msra.mxu0 0.0
    %39 = vmatprep.subr.mxu0 0.0
    %40 = vmatpush1.xpose.msra.mxu0 0.0
    %41 = vmatprep.subr.mxu0 0.0
    %42 = vmatpush1.xpose.msra.mxu0 0.0
    %43 = vmatprep.subr.mxu0 0.0
    %44 = vmatpush1.xpose.msra.mxu0 0.0
    %45 = vmatprep.subr.mxu0 0.0
    %46 = vmatpush1.xpose.msra.mxu0 0.0
    %47 = vmatprep.subr.mxu0 0.0
    %48 = vmatpush1.xpose.msra.mxu0 0.0
    %49 = vmatprep.subr.mxu0 0.0
    %50 = vmatpush1.xpose.msra.mxu0 0.0
    %51 = vmatprep.subr.mxu0 0.0
    %52 = vmatpush1.xpose.msra.mxu0 0.0
    %53 = vmatprep.subr.mxu0 0.0
    %54 = vmatpush1.xpose.msra.mxu0 0.0
    %55 = vmatprep.subr.mxu0 0.0
    %56 = vmatpush1.xpose.msra.mxu0 0.0
    %57 = vmatprep.subr.mxu0 0.0
    %58 = vmatpush1.xpose.msra.mxu0 0.0
    %59 = vmatprep.subr.mxu0 0.0
    %60 = vmatpush1.xpose.msra.mxu0 0.0
    %61 = vmatprep.subr.mxu0 0.0
    %62 = vmatpush1.xpose.msra.mxu0 0.0
    %63 = vmatprep.subr.mxu0 0.0
    %64 = vmatpush1.xpose.msra.mxu0 0.0
    %65 = vmatprep.subr.mxu0 0.0
    %66 = vmatpush1.xpose.msra.mxu0 0.0
    %67 = vmatprep.subr.mxu0 0.0
    %68 = vmatpush1.xpose.msra.mxu0 0.0
    %69 = vmatprep.subr.mxu0 0.0
    %70 = vmatpush1.xpose.msra.mxu0 0.0
    %71 = vmatprep.subr.mxu0 0.0
    %72 = vmatpush1.xpose.msra.mxu0 0.0
    %73 = vmatprep.subr.mxu0 0.0
    %74 = vmatpush1.xpose.msra.mxu0 0.0
    %75 = vmatprep.subr.mxu0 0.0
    %76 = vmatpush1.xpose.msra.mxu0 0.0
    %77 = vmatprep.subr.mxu0 0.0
    %78 = vmatpush1.xpose.msra.mxu0 0.0
    %79 = vmatprep.subr.mxu0 0.0
    %80 = vmatpush1.xpose.msra.mxu0 0.0
    %81 = vmatprep.subr.mxu0 0.0
    %82 = vmatpush1.xpose.msra.mxu0 0.0
    %83 = vmatprep.subr.mxu0 0.0
    %84 = vmatpush1.xpose.msra.mxu0 0.0
    %85 = vmatprep.subr.mxu0 0.0
    %86 = vmatpush1.xpose.msra.mxu0 0.0
    %87 = vmatprep.subr.mxu0 0.0
    %88 = vmatpush1.xpose.msra.mxu0 0.0
    %89 = vmatprep.subr.mxu0 0.0
    %90 = vmatpush1.xpose.msra.mxu0 0.0
    %91 = vmatprep.mubr.f32.mxu0 0.0
    %v92 = vand.u32 %v24, 4294901760
    %v93 = vsub.f32 %v24, %v92
    %v94 = vand.u32 %v93, 4294901760
    %v95 = vsub.f32 %v93, %v94
    %v96 = vand.u32 %v95, 4294901760
    %97 = vmatmul.mubr.f32.gmra.mrb[0].mxu0 %v96
    %v98 = vpop.f32.mrb[0].mxu0
    %v99 = vadd.f32 0.0, %v98
    %v100 = vpop.f32.mrb[0].mxu0
    %101 = vdwg.mxu0
    %102 = vmatprep.subr.mxu0 0.0
    %v103 = vand.u32 %v24, 4294901760
    %v104 = vsub.f32 %v24, %v103
    %v105 = vand.u32 %v104, 4294901760
    %v106 = vsub.f32 %v104, %v105
    %v107 = vand.u32 %v106, 4294901760
    %108 = vmatpush1.xpose.msra.mxu0 %v107
    %109 = vmatprep.subr.mxu0 0.0
    %110 = vmatpush1.xpose.msra.mxu0 0.0
    %111 = vmatprep.subr.mxu0 0.0
    %112 = vmatpush1.xpose.msra.mxu0 0.0
    %113 = vmatprep.subr.mxu0 0.0
    %114 = vmatpush1.xpose.msra.mxu0 0.0
    %115 = vmatprep.subr.mxu0 0.0
    %116 = vmatpush1.xpose.msra.mxu0 0.0
    %117 = vmatprep.subr.mxu0 0.0
    %118 = vmatpush1.xpose.msra.mxu0 0.0
    %119 = vmatprep.subr.mxu0 0.0
    %120 = vmatpush1.xpose.msra.mxu0 0.0
    %121 = vmatprep.subr.mxu0 0.0
    %122 = vmatpush1.xpose.msra.mxu0 0.0
    %123 = vmatprep.subr.mxu0 0.0
    %124 = vmatpush1.xpose.msra.mxu0 0.0
    %125 = vmatprep.subr.mxu0 0.0
    %126 = vmatpush1.xpose.msra.mxu0 0.0
    %127 = vmatprep.subr.mxu0 0.0
    %128 = vmatpush1.xpose.msra.mxu0 0.0
    %129 = vmatprep.subr.mxu0 0.0
    %130 = vmatpush1.xpose.msra.mxu0 0.0
    %131 = vmatprep.subr.mxu0 0.0
    %132 = vmatpush1.xpose.msra.mxu0 0.0
    %133 = vmatprep.subr.mxu0 0.0
    %134 = vmatpush1.xpose.msra.mxu0 0.0
    %135 = vmatprep.subr.mxu0 0.0
    %136 = vmatpush1.xpose.msra.mxu0 0.0
    %137 = vmatprep.subr.mxu0 0.0
    %138 = vmatpush1.xpose.msra.mxu0 0.0
    %139 = vmatprep.subr.mxu0 0.0
    %140 = vmatpush1.xpose.msra.mxu0 0.0
    %141 = vmatprep.subr.mxu0 0.0
    %142 = vmatpush1.xpose.msra.mxu0 0.0
    %143 = vmatprep.subr.mxu0 0.0
    %144 = vmatpush1.xpose.msra.mxu0 0.0
    %145 = vmatprep.subr.mxu0 0.0
    %146 = vmatpush1.xpose.msra.mxu0 0.0
    %147 = vmatprep.subr.mxu0 0.0
    %148 = vmatpush1.xpose.msra.mxu0 0.0
    %149 = vmatprep.subr.mxu0 0.0
    %150 = vmatpush1.xpose.msra.mxu0 0.0
    %151 = vmatprep.subr.mxu0 0.0
    %152 = vmatpush1.xpose.msra.mxu0 0.0
    %153 = vmatprep.subr.mxu0 0.0
    %154 = vmatpush1.xpose.msra.mxu0 0.0
    %155 = vmatprep.subr.mxu0 0.0
    %156 = vmatpush1.xpose.msra.mxu0 0.0
    %157 = vmatprep.subr.mxu0 0.0
    %158 = vmatpush1.xpose.msra.mxu0 0.0
    %159 = vmatprep.subr.mxu0 0.0
    %160 = vmatpush1.xpose.msra.mxu0 0.0
    %161 = vmatprep.subr.mxu0 0.0
    %162 = vmatpush1.xpose.msra.mxu0 0.0
    %163 = vmatprep.subr.mxu0 0.0
    %164 = vmatpush1.xpose.msra.mxu0 0.0
    %165 = vmatprep.subr.mxu0 0.0
    %166 = vmatpush1.xpose.msra.mxu0 0.0
    %167 = vmatprep.subr.mxu0 0.0
    %168 = vmatpush1.xpose.msra.mxu0 0.0
    %169 = vmatprep.subr.mxu0 0.0
    %170 = vmatpush1.xpose.msra.mxu0 0.0
    %171 = vmatprep.mubr.f32.mxu0 0.0
    %v172 = vand.u32 %v24, 4294901760
    %173 = vmatmul.mubr.f32.gmra.mrb[0].mxu0 %v172
    %v174 = vpop.f32.mrb[0].mxu0
    %v175 = vadd.f32 %v99, %v174
    %v176 = vpop.f32.mrb[0].mxu0
    %177 = vdwg.mxu0
    %178 = vmatprep.subr.mxu0 0.0
    %v179 = vand.u32 %v24, 4294901760
    %v180 = vsub.f32 %v24, %v179
    %181 = vmatpush1.xpose.msra.mxu0 %v180
    %182 = vmatprep.subr.mxu0 0.0
    %183 = vmatpush1.xpose.msra.mxu0 0.0
    %184 = vmatprep.subr.mxu0 0.0
    %185 = vmatpush1.xpose.msra.mxu0 0.0
    %186 = vmatprep.subr.mxu0 0.0
    %187 = vmatpush1.xpose.msra.mxu0 0.0
    %188 = vmatprep.subr.mxu0 0.0
    %189 = vmatpush1.xpose.msra.mxu0 0.0
    %190 = vmatprep.subr.mxu0 0.0
    %191 = vmatpush1.xpose.msra.mxu0 0.0
    %192 = vmatprep.subr.mxu0 0.0
    %193 = vmatpush1.xpose.msra.mxu0 0.0
    %194 = vmatprep.subr.mxu0 0.0
    %195 = vmatpush1.xpose.msra.mxu0 0.0
    %196 = vmatprep.subr.mxu0 0.0
    %197 = vmatpush1.xpose.msra.mxu0 0.0
    %198 = vmatprep.subr.mxu0 0.0
    %199 = vmatpush1.xpose.msra.mxu0 0.0
    %200 = vmatprep.subr.mxu0 0.0
    %201 = vmatpush1.xpose.msra.mxu0 0.0
    %202 = vmatprep.subr.mxu0 0.0
    %203 = vmatpush1.xpose.msra.mxu0 0.0
    %204 = vmatprep.subr.mxu0 0.0
    %205 = vmatpush1.xpose.msra.mxu0 0.0
    %206 = vmatprep.subr.mxu0 0.0
    %207 = vmatpush1.xpose.msra.mxu0 0.0
    %208 = vmatprep.subr.mxu0 0.0
    %209 = vmatpush1.xpose.msra.mxu0 0.0
    %210 = vmatprep.subr.mxu0 0.0
    %211 = vmatpush1.xpose.msra.mxu0 0.0
    %212 = vmatprep.subr.mxu0 0.0
    %213 = vmatpush1.xpose.msra.mxu0 0.0
    %214 = vmatprep.subr.mxu0 0.0
    %215 = vmatpush1.xpose.msra.mxu0 0.0
    %216 = vmatprep.subr.mxu0 0.0
    %217 = vmatpush1.xpose.msra.mxu0 0.0
    %218 = vmatprep.subr.mxu0 0.0
    %219 = vmatpush1.xpose.msra.mxu0 0.0
    %220 = vmatprep.subr.mxu0 0.0
    %221 = vmatpush1.xpose.msra.mxu0 0.0
    %222 = vmatprep.subr.mxu0 0.0
    %223 = vmatpush1.xpose.msra.mxu0 0.0
    %224 = vmatprep.subr.mxu0 0.0
    %225 = vmatpush1.xpose.msra.mxu0 0.0
    %226 = vmatprep.subr.mxu0 0.0
    %227 = vmatpush1.xpose.msra.mxu0 0.0
    %228 = vmatprep.subr.mxu0 0.0
    %229 = vmatpush1.xpose.msra.mxu0 0.0
    %230 = vmatprep.subr.mxu0 0.0
    %231 = vmatpush1.xpose.msra.mxu0 0.0
    %232 = vmatprep.subr.mxu0 0.0
    %233 = vmatpush1.xpose.msra.mxu0 0.0
    %234 = vmatprep.subr.mxu0 0.0
    %235 = vmatpush1.xpose.msra.mxu0 0.0
    %236 = vmatprep.subr.mxu0 0.0
    %237 = vmatpush1.xpose.msra.mxu0 0.0
    %238 = vmatprep.subr.mxu0 0.0
    %239 = vmatpush1.xpose.msra.mxu0 0.0
    %240 = vmatprep.subr.mxu0 0.0
    %241 = vmatpush1.xpose.msra.mxu0 0.0
    %242 = vmatprep.subr.mxu0 0.0
    %243 = vmatpush1.xpose.msra.mxu0 0.0
    %244 = vmatprep.mubr.f32.mxu0 0.0
    %v245 = vand.u32 %v24, 4294901760
    %v246 = vsub.f32 %v24, %v245
    %247 = vmatmul.mubr.f32.gmra.mrb[0].mxu0 %v246
    %v248 = vpop.f32.mrb[0].mxu0
    %v249 = vadd.f32 %v175, %v248
    %v250 = vpop.f32.mrb[0].mxu0
    %251 = vdwg.mxu0
    %252 = vmatprep.subr.mxu0 0.0
    %v253 = vand.u32 %v24, 4294901760
    %254 = vmatpush1.xpose.msra.mxu0 %v253
    %255 = vmatprep.subr.mxu0 0.0
    %256 = vmatpush1.xpose.msra.mxu0 0.0
    %257 = vmatprep.subr.mxu0 0.0
    %258 = vmatpush1.xpose.msra.mxu0 0.0
    %259 = vmatprep.subr.mxu0 0.0
    %260 = vmatpush1.xpose.msra.mxu0 0.0
    %261 = vmatprep.subr.mxu0 0.0
    %262 = vmatpush1.xpose.msra.mxu0 0.0
    %263 = vmatprep.subr.mxu0 0.0
    %264 = vmatpush1.xpose.msra.mxu0 0.0
    %265 = vmatprep.subr.mxu0 0.0
    %266 = vmatpush1.xpose.msra.mxu0 0.0
    %267 = vmatprep.subr.mxu0 0.0
    %268 = vmatpush1.xpose.msra.mxu0 0.0
    %269 = vmatprep.subr.mxu0 0.0
    %270 = vmatpush1.xpose.msra.mxu0 0.0
    %271 = vmatprep.subr.mxu0 0.0
    %272 = vmatpush1.xpose.msra.mxu0 0.0
    %273 = vmatprep.subr.mxu0 0.0
    %274 = vmatpush1.xpose.msra.mxu0 0.0
    %275 = vmatprep.subr.mxu0 0.0
    %276 = vmatpush1.xpose.msra.mxu0 0.0
    %277 = vmatprep.subr.mxu0 0.0
    %278 = vmatpush1.xpose.msra.mxu0 0.0
    %279 = vmatprep.subr.mxu0 0.0
    %280 = vmatpush1.xpose.msra.mxu0 0.0
    %281 = vmatprep.subr.mxu0 0.0
    %282 = vmatpush1.xpose.msra.mxu0 0.0
    %283 = vmatprep.subr.mxu0 0.0
    %284 = vmatpush1.xpose.msra.mxu0 0.0
    %285 = vmatprep.subr.mxu0 0.0
    %286 = vmatpush1.xpose.msra.mxu0 0.0
    %287 = vmatprep.subr.mxu0 0.0
    %288 = vmatpush1.xpose.msra.mxu0 0.0
    %289 = vmatprep.subr.mxu0 0.0
    %290 = vmatpush1.xpose.msra.mxu0 0.0
    %291 = vmatprep.subr.mxu0 0.0
    %292 = vmatpush1.xpose.msra.mxu0 0.0
    %293 = vmatprep.subr.mxu0 0.0
    %294 = vmatpush1.xpose.msra.mxu0 0.0
    %295 = vmatprep.subr.mxu0 0.0
    %296 = vmatpush1.xpose.msra.mxu0 0.0
    %297 = vmatprep.subr.mxu0 0.0
    %298 = vmatpush1.xpose.msra.mxu0 0.0
    %299 = vmatprep.subr.mxu0 0.0
    %300 = vmatpush1.xpose.msra.mxu0 0.0
    %301 = vmatprep.subr.mxu0 0.0
    %302 = vmatpush1.xpose.msra.mxu0 0.0
    %303 = vmatprep.subr.mxu0 0.0
    %304 = vmatpush1.xpose.msra.mxu0 0.0
    %305 = vmatprep.subr.mxu0 0.0
    %306 = vmatpush1.xpose.msra.mxu0 0.0
    %307 = vmatprep.subr.mxu0 0.0
    %308 = vmatpush1.xpose.msra.mxu0 0.0
    %309 = vmatprep.subr.mxu0 0.0
    %310 = vmatpush1.xpose.msra.mxu0 0.0
    %311 = vmatprep.subr.mxu0 0.0
    %312 = vmatpush1.xpose.msra.mxu0 0.0
    %313 = vmatprep.subr.mxu0 0.0
    %314 = vmatpush1.xpose.msra.mxu0 0.0
    %315 = vmatprep.subr.mxu0 0.0
    %316 = vmatpush1.xpose.msra.mxu0 0.0
    %317 = vmatprep.mubr.f32.mxu0 0.0
    %v318 = vand.u32 %v24, 4294901760
    %v319 = vsub.f32 %v24, %v318
    %v320 = vand.u32 %v319, 4294901760
    %321 = vmatmul.mubr.f32.gmra.mrb[0].mxu0 %v320
    %v322 = vpop.f32.mrb[0].mxu0
    %v323 = vadd.f32 %v249, %v322
    %v324 = vpop.f32.mrb[0].mxu0
    %325 = vdwg.mxu0
    %326 = vmatprep.subr.mxu0 0.0
    %v327 = vand.u32 %v24, 4294901760
    %v328 = vsub.f32 %v24, %v327
    %v329 = vand.u32 %v328, 4294901760
    %330 = vmatpush1.xpose.msra.mxu0 %v329
    %331 = vmatprep.subr.mxu0 0.0
    %332 = vmatpush1.xpose.msra.mxu0 0.0
    %333 = vmatprep.subr.mxu0 0.0
    %334 = vmatpush1.xpose.msra.mxu0 0.0
    %335 = vmatprep.subr.mxu0 0.0
    %336 = vmatpush1.xpose.msra.mxu0 0.0
    %337 = vmatprep.subr.mxu0 0.0
    %338 = vmatpush1.xpose.msra.mxu0 0.0
    %339 = vmatprep.subr.mxu0 0.0
    %340 = vmatpush1.xpose.msra.mxu0 0.0
    %341 = vmatprep.subr.mxu0 0.0
    %342 = vmatpush1.xpose.msra.mxu0 0.0
    %343 = vmatprep.subr.mxu0 0.0
    %344 = vmatpush1.xpose.msra.mxu0 0.0
    %345 = vmatprep.subr.mxu0 0.0
    %346 = vmatpush1.xpose.msra.mxu0 0.0
    %347 = vmatprep.subr.mxu0 0.0
    %348 = vmatpush1.xpose.msra.mxu0 0.0
    %349 = vmatprep.subr.mxu0 0.0
    %350 = vmatpush1.xpose.msra.mxu0 0.0
    %351 = vmatprep.subr.mxu0 0.0
    %352 = vmatpush1.xpose.msra.mxu0 0.0
    %353 = vmatprep.subr.mxu0 0.0
    %354 = vmatpush1.xpose.msra.mxu0 0.0
    %355 = vmatprep.subr.mxu0 0.0
    %356 = vmatpush1.xpose.msra.mxu0 0.0
    %357 = vmatprep.subr.mxu0 0.0
    %358 = vmatpush1.xpose.msra.mxu0 0.0
    %359 = vmatprep.subr.mxu0 0.0
    %360 = vmatpush1.xpose.msra.mxu0 0.0
    %361 = vmatprep.subr.mxu0 0.0
    %362 = vmatpush1.xpose.msra.mxu0 0.0
    %363 = vmatprep.subr.mxu0 0.0
    %364 = vmatpush1.xpose.msra.mxu0 0.0
    %365 = vmatprep.subr.mxu0 0.0
    %366 = vmatpush1.xpose.msra.mxu0 0.0
    %367 = vmatprep.subr.mxu0 0.0
    %368 = vmatpush1.xpose.msra.mxu0 0.0
    %369 = vmatprep.subr.mxu0 0.0
    %370 = vmatpush1.xpose.msra.mxu0 0.0
    %371 = vmatprep.subr.mxu0 0.0
    %372 = vmatpush1.xpose.msra.mxu0 0.0
    %373 = vmatprep.subr.mxu0 0.0
    %374 = vmatpush1.xpose.msra.mxu0 0.0
    %375 = vmatprep.subr.mxu0 0.0
    %376 = vmatpush1.xpose.msra.mxu0 0.0
    %377 = vmatprep.subr.mxu0 0.0
    %378 = vmatpush1.xpose.msra.mxu0 0.0
    %379 = vmatprep.subr.mxu0 0.0
    %380 = vmatpush1.xpose.msra.mxu0 0.0
    %381 = vmatprep.subr.mxu0 0.0
    %382 = vmatpush1.xpose.msra.mxu0 0.0
    %383 = vmatprep.subr.mxu0 0.0
    %384 = vmatpush1.xpose.msra.mxu0 0.0
    %385 = vmatprep.subr.mxu0 0.0
    %386 = vmatpush1.xpose.msra.mxu0 0.0
    %387 = vmatprep.subr.mxu0 0.0
    %388 = vmatpush1.xpose.msra.mxu0 0.0
    %389 = vmatprep.subr.mxu0 0.0
    %390 = vmatpush1.xpose.msra.mxu0 0.0
    %391 = vmatprep.subr.mxu0 0.0
    %392 = vmatpush1.xpose.msra.mxu0 0.0
    %393 = vmatprep.mubr.f32.mxu0 0.0
    %v394 = vand.u32 %v24, 4294901760
    %395 = vmatmul.mubr.f32.gmra.mrb[0].mxu0 %v394
    %v396 = vpop.f32.mrb[0].mxu0
    %v397 = vadd.f32 %v323, %v396
    %v398 = vpop.f32.mrb[0].mxu0
    %399 = vdwg.mxu0
    %400 = vmatprep.subr.mxu0 0.0
    %v401 = vand.u32 %v24, 4294901760
    %402 = vmatpush1.xpose.msra.mxu0 %v401
    %403 = vmatprep.subr.mxu0 0.0
    %404 = vmatpush1.xpose.msra.mxu0 0.0
    %405 = vmatprep.subr.mxu0 0.0
    %406 = vmatpush1.xpose.msra.mxu0 0.0
    %407 = vmatprep.subr.mxu0 0.0
    %408 = vmatpush1.xpose.msra.mxu0 0.0
    %409 = vmatprep.subr.mxu0 0.0
    %410 = vmatpush1.xpose.msra.mxu0 0.0
    %411 = vmatprep.subr.mxu0 0.0
    %412 = vmatpush1.xpose.msra.mxu0 0.0
    %413 = vmatprep.subr.mxu0 0.0
    %414 = vmatpush1.xpose.msra.mxu0 0.0
    %415 = vmatprep.subr.mxu0 0.0
    %416 = vmatpush1.xpose.msra.mxu0 0.0
    %417 = vmatprep.subr.mxu0 0.0
    %418 = vmatpush1.xpose.msra.mxu0 0.0
    %419 = vmatprep.subr.mxu0 0.0
    %420 = vmatpush1.xpose.msra.mxu0 0.0
    %421 = vmatprep.subr.mxu0 0.0
    %422 = vmatpush1.xpose.msra.mxu0 0.0
    %423 = vmatprep.subr.mxu0 0.0
    %424 = vmatpush1.xpose.msra.mxu0 0.0
    %425 = vmatprep.subr.mxu0 0.0
    %426 = vmatpush1.xpose.msra.mxu0 0.0
    %427 = vmatprep.subr.mxu0 0.0
    %428 = vmatpush1.xpose.msra.mxu0 0.0
    %429 = vmatprep.subr.mxu0 0.0
    %430 = vmatpush1.xpose.msra.mxu0 0.0
    %431 = vmatprep.subr.mxu0 0.0
    %432 = vmatpush1.xpose.msra.mxu0 0.0
    %433 = vmatprep.subr.mxu0 0.0
    %434 = vmatpush1.xpose.msra.mxu0 0.0
    %435 = vmatprep.subr.mxu0 0.0
    %436 = vmatpush1.xpose.msra.mxu0 0.0
    %437 = vmatprep.subr.mxu0 0.0
    %438 = vmatpush1.xpose.msra.mxu0 0.0
    %439 = vmatprep.subr.mxu0 0.0
    %440 = vmatpush1.xpose.msra.mxu0 0.0
    %441 = vmatprep.subr.mxu0 0.0
    %442 = vmatpush1.xpose.msra.mxu0 0.0
    %443 = vmatprep.subr.mxu0 0.0
    %444 = vmatpush1.xpose.msra.mxu0 0.0
    %445 = vmatprep.subr.mxu0 0.0
    %446 = vmatpush1.xpose.msra.mxu0 0.0
    %447 = vmatprep.subr.mxu0 0.0
    %448 = vmatpush1.xpose.msra.mxu0 0.0
    %449 = vmatprep.subr.mxu0 0.0
    %450 = vmatpush1.xpose.msra.mxu0 0.0
    %451 = vmatprep.subr.mxu0 0.0
    %452 = vmatpush1.xpose.msra.mxu0 0.0
    %453 = vmatprep.subr.mxu0 0.0
    %454 = vmatpush1.xpose.msra.mxu0 0.0
    %455 = vmatprep.subr.mxu0 0.0
    %456 = vmatpush1.xpose.msra.mxu0 0.0
    %457 = vmatprep.subr.mxu0 0.0
    %458 = vmatpush1.xpose.msra.mxu0 0.0
    %459 = vmatprep.subr.mxu0 0.0
    %460 = vmatpush1.xpose.msra.mxu0 0.0
    %461 = vmatprep.subr.mxu0 0.0
    %462 = vmatpush1.xpose.msra.mxu0 0.0
    %463 = vmatprep.subr.mxu0 0.0
    %464 = vmatpush1.xpose.msra.mxu0 0.0
    %465 = vmatprep.mubr.f32.mxu0 0.0
    %v466 = vand.u32 %v24, 4294901760
    %467 = vmatmul.mubr.f32.gmra.mrb[0].mxu0 %v466
    %v468 = vpop.f32.mrb[0].mxu0
    %v469 = vadd.f32 %v397, %v468
    %v470 = vpop.f32.mrb[0].mxu0
    %471 = vdwg.mxu0
    loop: start=0, step=1, limit=512
    $region10: #{tpu_custom_call.1} parent=1 // loop_pre_header
      _
    $region11: #{tpu_custom_call.1} parent=1 // loop_header
      %s473 = sphi 0, %s477
      %p474 = scmp.ge.s32.totalorder %s473, 512
      %v478 = vphi 1.0, %v946
    $region12: #{tpu_custom_call.1} parent=1 // loop_header_branch
      %476 = sbr.rel (%p474) target = $region16
    $region13: #{tpu_custom_call.1} parent=1 // loop_body
      %vm479 = vcmask 64512
      %v481 = vsel %vm479, %v469, 0
      %483 = vmatprep.subr.mxu0 0.0
      %v484 = vand.u32 %v478, 4294901760
      %485 = vmatpush1.msra.mxu0 %v484
      %486 = vmatprep.subr.mxu0 0.0
      %487 = vmatpush1.msra.mxu0 0.0
      %488 = vmatprep.subr.mxu0 0.0
      %489 = vmatpush1.msra.mxu0 0.0
      %490 = vmatprep.subr.mxu0 0.0
      %491 = vmatpush1.msra.mxu0 0.0
      %492 = vmatprep.subr.mxu0 0.0
      %493 = vmatpush1.msra.mxu0 0.0
      %494 = vmatprep.subr.mxu0 0.0
      %495 = vmatpush1.msra.mxu0 0.0
      %496 = vmatprep.subr.mxu0 0.0
      %497 = vmatpush1.msra.mxu0 0.0
      %498 = vmatprep.subr.mxu0 0.0
      %499 = vmatpush1.msra.mxu0 0.0
      %500 = vmatprep.subr.mxu0 0.0
      %501 = vmatpush1.msra.mxu0 0.0
      %502 = vmatprep.subr.mxu0 0.0
      %503 = vmatpush1.msra.mxu0 0.0
      %504 = vmatprep.subr.mxu0 0.0
      %505 = vmatpush1.msra.mxu0 0.0
      %506 = vmatprep.subr.mxu0 0.0
      %507 = vmatpush1.msra.mxu0 0.0
      %508 = vmatprep.subr.mxu0 0.0
      %509 = vmatpush1.msra.mxu0 0.0
      %510 = vmatprep.subr.mxu0 0.0
      %511 = vmatpush1.msra.mxu0 0.0
      %512 = vmatprep.subr.mxu0 0.0
      %513 = vmatpush1.msra.mxu0 0.0
      %514 = vmatprep.subr.mxu0 0.0
      %515 = vmatpush1.msra.mxu0 0.0
      %516 = vmatprep.subr.mxu0 0.0
      %517 = vmatpush1.msra.mxu0 0.0
      %518 = vmatprep.subr.mxu0 0.0
      %519 = vmatpush1.msra.mxu0 0.0
      %520 = vmatprep.subr.mxu0 0.0
      %521 = vmatpush1.msra.mxu0 0.0
      %522 = vmatprep.subr.mxu0 0.0
      %523 = vmatpush1.msra.mxu0 0.0
      %524 = vmatprep.subr.mxu0 0.0
      %525 = vmatpush1.msra.mxu0 0.0
      %526 = vmatprep.subr.mxu0 0.0
      %527 = vmatpush1.msra.mxu0 0.0
      %528 = vmatprep.subr.mxu0 0.0
      %529 = vmatpush1.msra.mxu0 0.0
      %530 = vmatprep.subr.mxu0 0.0
      %531 = vmatpush1.msra.mxu0 0.0
      %532 = vmatprep.subr.mxu0 0.0
      %533 = vmatpush1.msra.mxu0 0.0
      %534 = vmatprep.subr.mxu0 0.0
      %535 = vmatpush1.msra.mxu0 0.0
      %536 = vmatprep.subr.mxu0 0.0
      %537 = vmatpush1.msra.mxu0 0.0
      %538 = vmatprep.subr.mxu0 0.0
      %539 = vmatpush1.msra.mxu0 0.0
      %540 = vmatprep.subr.mxu0 0.0
      %541 = vmatpush1.msra.mxu0 0.0
      %542 = vmatprep.subr.mxu0 0.0
      %543 = vmatpush1.msra.mxu0 0.0
      %544 = vmatprep.subr.mxu0 0.0
      %545 = vmatpush1.msra.mxu0 0.0
      %546 = vmatprep.subr.mxu0 0.0
      %547 = vmatpush1.msra.mxu0 0.0
      %548 = vmatprep.mubr.f32.mxu0 0.0
      %v549 = vand.u32 %v481, 4294901760
      %v550 = vsub.f32 %v481, %v549
      %v551 = vand.u32 %v550, 4294901760
      %v552 = vsub.f32 %v550, %v551
      %v553 = vand.u32 %v552, 4294901760
      %554 = vmatmul.mubr.f32.gmra.mrb[0].mxu0 %v553
      %v555 = vpop.f32.mrb[0].mxu0
      %v556 = vadd.f32 0.0, %v555
      %v557 = vpop.f32.mrb[0].mxu0
      %558 = vdwg.mxu0
      %559 = vmatprep.subr.mxu0 0.0
      %v560 = vand.u32 %v478, 4294901760
      %v561 = vsub.f32 %v478, %v560
      %v562 = vand.u32 %v561, 4294901760
      %v563 = vsub.f32 %v561, %v562
      %v564 = vand.u32 %v563, 4294901760
      %565 = vmatpush1.msra.mxu0 %v564
      %566 = vmatprep.subr.mxu0 0.0
      %567 = vmatpush1.msra.mxu0 0.0
      %568 = vmatprep.subr.mxu0 0.0
      %569 = vmatpush1.msra.mxu0 0.0
      %570 = vmatprep.subr.mxu0 0.0
      %571 = vmatpush1.msra.mxu0 0.0
      %572 = vmatprep.subr.mxu0 0.0
      %573 = vmatpush1.msra.mxu0 0.0
      %574 = vmatprep.subr.mxu0 0.0
      %575 = vmatpush1.msra.mxu0 0.0
      %576 = vmatprep.subr.mxu0 0.0
      %577 = vmatpush1.msra.mxu0 0.0
      %578 = vmatprep.subr.mxu0 0.0
      %579 = vmatpush1.msra.mxu0 0.0
      %580 = vmatprep.subr.mxu0 0.0
      %581 = vmatpush1.msra.mxu0 0.0
      %582 = vmatprep.subr.mxu0 0.0
      %583 = vmatpush1.msra.mxu0 0.0
      %584 = vmatprep.subr.mxu0 0.0
      %585 = vmatpush1.msra.mxu0 0.0
      %586 = vmatprep.subr.mxu0 0.0
      %587 = vmatpush1.msra.mxu0 0.0
      %588 = vmatprep.subr.mxu0 0.0
      %589 = vmatpush1.msra.mxu0 0.0
      %590 = vmatprep.subr.mxu0 0.0
      %591 = vmatpush1.msra.mxu0 0.0
      %592 = vmatprep.subr.mxu0 0.0
      %593 = vmatpush1.msra.mxu0 0.0
      %594 = vmatprep.subr.mxu0 0.0
      %595 = vmatpush1.msra.mxu0 0.0
      %596 = vmatprep.subr.mxu0 0.0
      %597 = vmatpush1.msra.mxu0 0.0
      %598 = vmatprep.subr.mxu0 0.0
      %599 = vmatpush1.msra.mxu0 0.0
      %600 = vmatprep.subr.mxu0 0.0
      %601 = vmatpush1.msra.mxu0 0.0
      %602 = vmatprep.subr.mxu0 0.0
      %603 = vmatpush1.msra.mxu0 0.0
      %604 = vmatprep.subr.mxu0 0.0
      %605 = vmatpush1.msra.mxu0 0.0
      %606 = vmatprep.subr.mxu0 0.0
      %607 = vmatpush1.msra.mxu0 0.0
      %608 = vmatprep.subr.mxu0 0.0
      %609 = vmatpush1.msra.mxu0 0.0
      %610 = vmatprep.subr.mxu0 0.0
      %611 = vmatpush1.msra.mxu0 0.0
      %612 = vmatprep.subr.mxu0 0.0
      %613 = vmatpush1.msra.mxu0 0.0
      %614 = vmatprep.subr.mxu0 0.0
      %615 = vmatpush1.msra.mxu0 0.0
      %616 = vmatprep.subr.mxu0 0.0
      %617 = vmatpush1.msra.mxu0 0.0
      %618 = vmatprep.subr.mxu0 0.0
      %619 = vmatpush1.msra.mxu0 0.0
      %620 = vmatprep.subr.mxu0 0.0
      %621 = vmatpush1.msra.mxu0 0.0
      %622 = vmatprep.subr.mxu0 0.0
      %623 = vmatpush1.msra.mxu0 0.0
      %624 = vmatprep.subr.mxu0 0.0
      %625 = vmatpush1.msra.mxu0 0.0
      %626 = vmatprep.subr.mxu0 0.0
      %627 = vmatpush1.msra.mxu0 0.0
      %628 = vmatprep.mubr.f32.mxu0 0.0
      %v629 = vand.u32 %v481, 4294901760
      %630 = vmatmul.mubr.f32.gmra.mrb[0].mxu0 %v629
      %v631 = vpop.f32.mrb[0].mxu0
      %v632 = vadd.f32 %v556, %v631
      %v633 = vpop.f32.mrb[0].mxu0
      %634 = vdwg.mxu0
      %635 = vmatprep.subr.mxu0 0.0
      %v636 = vand.u32 %v478, 4294901760
      %v637 = vsub.f32 %v478, %v636
      %638 = vmatpush1.msra.mxu0 %v637
      %639 = vmatprep.subr.mxu0 0.0
      %640 = vmatpush1.msra.mxu0 0.0
      %641 = vmatprep.subr.mxu0 0.0
      %642 = vmatpush1.msra.mxu0 0.0
      %643 = vmatprep.subr.mxu0 0.0
      %644 = vmatpush1.msra.mxu0 0.0
      %645 = vmatprep.subr.mxu0 0.0
      %646 = vmatpush1.msra.mxu0 0.0
      %647 = vmatprep.subr.mxu0 0.0
      %648 = vmatpush1.msra.mxu0 0.0
      %649 = vmatprep.subr.mxu0 0.0
      %650 = vmatpush1.msra.mxu0 0.0
      %651 = vmatprep.subr.mxu0 0.0
      %652 = vmatpush1.msra.mxu0 0.0
      %653 = vmatprep.subr.mxu0 0.0
      %654 = vmatpush1.msra.mxu0 0.0
      %655 = vmatprep.subr.mxu0 0.0
      %656 = vmatpush1.msra.mxu0 0.0
      %657 = vmatprep.subr.mxu0 0.0
      %658 = vmatpush1.msra.mxu0 0.0
      %659 = vmatprep.subr.mxu0 0.0
      %660 = vmatpush1.msra.mxu0 0.0
      %661 = vmatprep.subr.mxu0 0.0
      %662 = vmatpush1.msra.mxu0 0.0
      %663 = vmatprep.subr.mxu0 0.0
      %664 = vmatpush1.msra.mxu0 0.0
      %665 = vmatprep.subr.mxu0 0.0
      %666 = vmatpush1.msra.mxu0 0.0
      %667 = vmatprep.subr.mxu0 0.0
      %668 = vmatpush1.msra.mxu0 0.0
      %669 = vmatprep.subr.mxu0 0.0
      %670 = vmatpush1.msra.mxu0 0.0
      %671 = vmatprep.subr.mxu0 0.0
      %672 = vmatpush1.msra.mxu0 0.0
      %673 = vmatprep.subr.mxu0 0.0
      %674 = vmatpush1.msra.mxu0 0.0
      %675 = vmatprep.subr.mxu0 0.0
      %676 = vmatpush1.msra.mxu0 0.0
      %677 = vmatprep.subr.mxu0 0.0
      %678 = vmatpush1.msra.mxu0 0.0
      %679 = vmatprep.subr.mxu0 0.0
      %680 = vmatpush1.msra.mxu0 0.0
      %681 = vmatprep.subr.mxu0 0.0
      %682 = vmatpush1.msra.mxu0 0.0
      %683 = vmatprep.subr.mxu0 0.0
      %684 = vmatpush1.msra.mxu0 0.0
      %685 = vmatprep.subr.mxu0 0.0
      %686 = vmatpush1.msra.mxu0 0.0
      %687 = vmatprep.subr.mxu0 0.0
      %688 = vmatpush1.msra.mxu0 0.0
      %689 = vmatprep.subr.mxu0 0.0
      %690 = vmatpush1.msra.mxu0 0.0
      %691 = vmatprep.subr.mxu0 0.0
      %692 = vmatpush1.msra.mxu0 0.0
      %693 = vmatprep.subr.mxu0 0.0
      %694 = vmatpush1.msra.mxu0 0.0
      %695 = vmatprep.subr.mxu0 0.0
      %696 = vmatpush1.msra.mxu0 0.0
      %697 = vmatprep.subr.mxu0 0.0
      %698 = vmatpush1.msra.mxu0 0.0
      %699 = vmatprep.subr.mxu0 0.0
      %700 = vmatpush1.msra.mxu0 0.0
      %701 = vmatprep.mubr.f32.mxu0 0.0
      %v702 = vand.u32 %v481, 4294901760
      %v703 = vsub.f32 %v481, %v702
      %704 = vmatmul.mubr.f32.gmra.mrb[0].mxu0 %v703
      %v705 = vpop.f32.mrb[0].mxu0
      %v706 = vadd.f32 %v632, %v705
      %v707 = vpop.f32.mrb[0].mxu0
      %708 = vdwg.mxu0
      %709 = vmatprep.subr.mxu0 0.0
      %v710 = vand.u32 %v478, 4294901760
      %711 = vmatpush1.msra.mxu0 %v710
      %712 = vmatprep.subr.mxu0 0.0
      %713 = vmatpush1.msra.mxu0 0.0
      %714 = vmatprep.subr.mxu0 0.0
      %715 = vmatpush1.msra.mxu0 0.0
      %716 = vmatprep.subr.mxu0 0.0
      %717 = vmatpush1.msra.mxu0 0.0
      %718 = vmatprep.subr.mxu0 0.0
      %719 = vmatpush1.msra.mxu0 0.0
      %720 = vmatprep.subr.mxu0 0.0
      %721 = vmatpush1.msra.mxu0 0.0
      %722 = vmatprep.subr.mxu0 0.0
      %723 = vmatpush1.msra.mxu0 0.0
      %724 = vmatprep.subr.mxu0 0.0
      %725 = vmatpush1.msra.mxu0 0.0
      %726 = vmatprep.subr.mxu0 0.0
      %727 = vmatpush1.msra.mxu0 0.0
      %728 = vmatprep.subr.mxu0 0.0
      %729 = vmatpush1.msra.mxu0 0.0
      %730 = vmatprep.subr.mxu0 0.0
      %731 = vmatpush1.msra.mxu0 0.0
      %732 = vmatprep.subr.mxu0 0.0
      %733 = vmatpush1.msra.mxu0 0.0
      %734 = vmatprep.subr.mxu0 0.0
      %735 = vmatpush1.msra.mxu0 0.0
      %736 = vmatprep.subr.mxu0 0.0
      %737 = vmatpush1.msra.mxu0 0.0
      %738 = vmatprep.subr.mxu0 0.0
      %739 = vmatpush1.msra.mxu0 0.0
      %740 = vmatprep.subr.mxu0 0.0
      %741 = vmatpush1.msra.mxu0 0.0
      %742 = vmatprep.subr.mxu0 0.0
      %743 = vmatpush1.msra.mxu0 0.0
      %744 = vmatprep.subr.mxu0 0.0
      %745 = vmatpush1.msra.mxu0 0.0
      %746 = vmatprep.subr.mxu0 0.0
      %747 = vmatpush1.msra.mxu0 0.0
      %748 = vmatprep.subr.mxu0 0.0
      %749 = vmatpush1.msra.mxu0 0.0
      %750 = vmatprep.subr.mxu0 0.0
      %751 = vmatpush1.msra.mxu0 0.0
      %752 = vmatprep.subr.mxu0 0.0
      %753 = vmatpush1.msra.mxu0 0.0
      %754 = vmatprep.subr.mxu0 0.0
      %755 = vmatpush1.msra.mxu0 0.0
      %756 = vmatprep.subr.mxu0 0.0
      %757 = vmatpush1.msra.mxu0 0.0
      %758 = vmatprep.subr.mxu0 0.0
      %759 = vmatpush1.msra.mxu0 0.0
      %760 = vmatprep.subr.mxu0 0.0
      %761 = vmatpush1.msra.mxu0 0.0
      %762 = vmatprep.subr.mxu0 0.0
      %763 = vmatpush1.msra.mxu0 0.0
      %764 = vmatprep.subr.mxu0 0.0
      %765 = vmatpush1.msra.mxu0 0.0
      %766 = vmatprep.subr.mxu0 0.0
      %767 = vmatpush1.msra.mxu0 0.0
      %768 = vmatprep.subr.mxu0 0.0
      %769 = vmatpush1.msra.mxu0 0.0
      %770 = vmatprep.subr.mxu0 0.0
      %771 = vmatpush1.msra.mxu0 0.0
      %772 = vmatprep.subr.mxu0 0.0
      %773 = vmatpush1.msra.mxu0 0.0
      %774 = vmatprep.mubr.f32.mxu0 0.0
      %v775 = vand.u32 %v481, 4294901760
      %v776 = vsub.f32 %v481, %v775
      %v777 = vand.u32 %v776, 4294901760
      %778 = vmatmul.mubr.f32.gmra.mrb[0].mxu0 %v777
      %v779 = vpop.f32.mrb[0].mxu0
      %v780 = vadd.f32 %v706, %v779
      %v781 = vpop.f32.mrb[0].mxu0
      %782 = vdwg.mxu0
      %783 = vmatprep.subr.mxu0 0.0
      %v784 = vand.u32 %v478, 4294901760
      %v785 = vsub.f32 %v478, %v784
      %v786 = vand.u32 %v785, 4294901760
      %787 = vmatpush1.msra.mxu0 %v786
      %788 = vmatprep.subr.mxu0 0.0
      %789 = vmatpush1.msra.mxu0 0.0
      %790 = vmatprep.subr.mxu0 0.0
      %791 = vmatpush1.msra.mxu0 0.0
      %792 = vmatprep.subr.mxu0 0.0
      %793 = vmatpush1.msra.mxu0 0.0
      %794 = vmatprep.subr.mxu0 0.0
      %795 = vmatpush1.msra.mxu0 0.0
      %796 = vmatprep.subr.mxu0 0.0
      %797 = vmatpush1.msra.mxu0 0.0
      %798 = vmatprep.subr.mxu0 0.0
      %799 = vmatpush1.msra.mxu0 0.0
      %800 = vmatprep.subr.mxu0 0.0
      %801 = vmatpush1.msra.mxu0 0.0
      %802 = vmatprep.subr.mxu0 0.0
      %803 = vmatpush1.msra.mxu0 0.0
      %804 = vmatprep.subr.mxu0 0.0
      %805 = vmatpush1.msra.mxu0 0.0
      %806 = vmatprep.subr.mxu0 0.0
      %807 = vmatpush1.msra.mxu0 0.0
      %808 = vmatprep.subr.mxu0 0.0
      %809 = vmatpush1.msra.mxu0 0.0
      %810 = vmatprep.subr.mxu0 0.0
      %811 = vmatpush1.msra.mxu0 0.0
      %812 = vmatprep.subr.mxu0 0.0
      %813 = vmatpush1.msra.mxu0 0.0
      %814 = vmatprep.subr.mxu0 0.0
      %815 = vmatpush1.msra.mxu0 0.0
      %816 = vmatprep.subr.mxu0 0.0
      %817 = vmatpush1.msra.mxu0 0.0
      %818 = vmatprep.subr.mxu0 0.0
      %819 = vmatpush1.msra.mxu0 0.0
      %820 = vmatprep.subr.mxu0 0.0
      %821 = vmatpush1.msra.mxu0 0.0
      %822 = vmatprep.subr.mxu0 0.0
      %823 = vmatpush1.msra.mxu0 0.0
      %824 = vmatprep.subr.mxu0 0.0
      %825 = vmatpush1.msra.mxu0 0.0
      %826 = vmatprep.subr.mxu0 0.0
      %827 = vmatpush1.msra.mxu0 0.0
      %828 = vmatprep.subr.mxu0 0.0
      %829 = vmatpush1.msra.mxu0 0.0
      %830 = vmatprep.subr.mxu0 0.0
      %831 = vmatpush1.msra.mxu0 0.0
      %832 = vmatprep.subr.mxu0 0.0
      %833 = vmatpush1.msra.mxu0 0.0
      %834 = vmatprep.subr.mxu0 0.0
      %835 = vmatpush1.msra.mxu0 0.0
      %836 = vmatprep.subr.mxu0 0.0
      %837 = vmatpush1.msra.mxu0 0.0
      %838 = vmatprep.subr.mxu0 0.0
      %839 = vmatpush1.msra.mxu0 0.0
      %840 = vmatprep.subr.mxu0 0.0
      %841 = vmatpush1.msra.mxu0 0.0
      %842 = vmatprep.subr.mxu0 0.0
      %843 = vmatpush1.msra.mxu0 0.0
      %844 = vmatprep.subr.mxu0 0.0
      %845 = vmatpush1.msra.mxu0 0.0
      %846 = vmatprep.subr.mxu0 0.0
      %847 = vmatpush1.msra.mxu0 0.0
      %848 = vmatprep.subr.mxu0 0.0
      %849 = vmatpush1.msra.mxu0 0.0
      %850 = vmatprep.mubr.f32.mxu0 0.0
      %v851 = vand.u32 %v481, 4294901760
      %852 = vmatmul.mubr.f32.gmra.mrb[0].mxu0 %v851
      %v853 = vpop.f32.mrb[0].mxu0
      %v854 = vadd.f32 %v780, %v853
      %v855 = vpop.f32.mrb[0].mxu0
      %856 = vdwg.mxu0
      %857 = vmatprep.subr.mxu0 0.0
      %v858 = vand.u32 %v478, 4294901760
      %859 = vmatpush1.msra.mxu0 %v858
      %860 = vmatprep.subr.mxu0 0.0
      %861 = vmatpush1.msra.mxu0 0.0
      %862 = vmatprep.subr.mxu0 0.0
      %863 = vmatpush1.msra.mxu0 0.0
      %864 = vmatprep.subr.mxu0 0.0
      %865 = vmatpush1.msra.mxu0 0.0
      %866 = vmatprep.subr.mxu0 0.0
      %867 = vmatpush1.msra.mxu0 0.0
      %868 = vmatprep.subr.mxu0 0.0
      %869 = vmatpush1.msra.mxu0 0.0
      %870 = vmatprep.subr.mxu0 0.0
      %871 = vmatpush1.msra.mxu0 0.0
      %872 = vmatprep.subr.mxu0 0.0
      %873 = vmatpush1.msra.mxu0 0.0
      %874 = vmatprep.subr.mxu0 0.0
      %875 = vmatpush1.msra.mxu0 0.0
      %876 = vmatprep.subr.mxu0 0.0
      %877 = vmatpush1.msra.mxu0 0.0
      %878 = vmatprep.subr.mxu0 0.0
      %879 = vmatpush1.msra.mxu0 0.0
      %880 = vmatprep.subr.mxu0 0.0
      %881 = vmatpush1.msra.mxu0 0.0
      %882 = vmatprep.subr.mxu0 0.0
      %883 = vmatpush1.msra.mxu0 0.0
      %884 = vmatprep.subr.mxu0 0.0
      %885 = vmatpush1.msra.mxu0 0.0
      %886 = vmatprep.subr.mxu0 0.0
      %887 = vmatpush1.msra.mxu0 0.0
      %888 = vmatprep.subr.mxu0 0.0
      %889 = vmatpush1.msra.mxu0 0.0
      %890 = vmatprep.subr.mxu0 0.0
      %891 = vmatpush1.msra.mxu0 0.0
      %892 = vmatprep.subr.mxu0 0.0
      %893 = vmatpush1.msra.mxu0 0.0
      %894 = vmatprep.subr.mxu0 0.0
      %895 = vmatpush1.msra.mxu0 0.0
      %896 = vmatprep.subr.mxu0 0.0
      %897 = vmatpush1.msra.mxu0 0.0
      %898 = vmatprep.subr.mxu0 0.0
      %899 = vmatpush1.msra.mxu0 0.0
      %900 = vmatprep.subr.mxu0 0.0
      %901 = vmatpush1.msra.mxu0 0.0
      %902 = vmatprep.subr.mxu0 0.0
      %903 = vmatpush1.msra.mxu0 0.0
      %904 = vmatprep.subr.mxu0 0.0
      %905 = vmatpush1.msra.mxu0 0.0
      %906 = vmatprep.subr.mxu0 0.0
      %907 = vmatpush1.msra.mxu0 0.0
      %908 = vmatprep.subr.mxu0 0.0
      %909 = vmatpush1.msra.mxu0 0.0
      %910 = vmatprep.subr.mxu0 0.0
      %911 = vmatpush1.msra.mxu0 0.0
      %912 = vmatprep.subr.mxu0 0.0
      %913 = vmatpush1.msra.mxu0 0.0
      %914 = vmatprep.subr.mxu0 0.0
      %915 = vmatpush1.msra.mxu0 0.0
      %916 = vmatprep.subr.mxu0 0.0
      %917 = vmatpush1.msra.mxu0 0.0
      %918 = vmatprep.subr.mxu0 0.0
      %919 = vmatpush1.msra.mxu0 0.0
      %920 = vmatprep.subr.mxu0 0.0
      %921 = vmatpush1.msra.mxu0 0.0
      %922 = vmatprep.mubr.f32.mxu0 0.0
      %v923 = vand.u32 %v481, 4294901760
      %924 = vmatmul.mubr.f32.gmra.mrb[0].mxu0 %v923
      %v925 = vpop.f32.mrb[0].mxu0
      %v926 = vadd.f32 %v854, %v925
      %v927 = vpop.f32.mrb[0].mxu0
      %928 = vdwg.mxu0
      %v929 = vmul.f32 %v926, %v926
      %vm930 = vcmask 7168
      %v931 = vsel %vm930, %v929, 0.0
      %932 = vadd.xlane.f32.xlu0 %v931
      %v933 = vpop.xlane.xlu0 %932
      %v934 = vrot.slane %v933, 4
      %v935 = vadd.f32 %v933, %v934
      %v936 = vrot.slane %v935, 2
      %v937 = vadd.f32 %v935, %v936
      %v938 = vrot.slane %v937, 1
      %v939 = vadd.f32 %v937, %v938
      %s940 = vtos %v939
      %s941 = sadd.f32 %s940, 1e-30
      %v942 = vstv %s941
      %v943 = vrsqrt.pop %v942
      %s944 = vtos %v943
      %v945 = vstv %s944
      %v946 = vmul.f32 %v926, %v945
    $region14: #{tpu_custom_call.1} parent=1 // loop_footer
      %s477 = sadd.s32 1, %s473
    $region15: #{tpu_custom_call.1} parent=1 // loop_footer_branch
      %472 = sbr.rel target = $region11
    $region16: #{tpu_custom_call.1} parent=1 // loop_exit
      _
    %vm947 = vcmask 64512
    %v949 = vsel %vm947, %v469, 0
    %951 = vmatprep.subr.mxu0 0.0
    %v952 = vand.u32 %v478, 4294901760
    %953 = vmatpush1.msra.mxu0 %v952
    %954 = vmatprep.subr.mxu0 0.0
    %955 = vmatpush1.msra.mxu0 0.0
    %956 = vmatprep.subr.mxu0 0.0
    %957 = vmatpush1.msra.mxu0 0.0
    %958 = vmatprep.subr.mxu0 0.0
    %959 = vmatpush1.msra.mxu0 0.0
    %960 = vmatprep.subr.mxu0 0.0
    %961 = vmatpush1.msra.mxu0 0.0
    %962 = vmatprep.subr.mxu0 0.0
    %963 = vmatpush1.msra.mxu0 0.0
    %964 = vmatprep.subr.mxu0 0.0
    %965 = vmatpush1.msra.mxu0 0.0
    %966 = vmatprep.subr.mxu0 0.0
    %967 = vmatpush1.msra.mxu0 0.0
    %968 = vmatprep.subr.mxu0 0.0
    %969 = vmatpush1.msra.mxu0 0.0
    %970 = vmatprep.subr.mxu0 0.0
    %971 = vmatpush1.msra.mxu0 0.0
    %972 = vmatprep.subr.mxu0 0.0
    %973 = vmatpush1.msra.mxu0 0.0
    %974 = vmatprep.subr.mxu0 0.0
    %975 = vmatpush1.msra.mxu0 0.0
    %976 = vmatprep.subr.mxu0 0.0
    %977 = vmatpush1.msra.mxu0 0.0
    %978 = vmatprep.subr.mxu0 0.0
    %979 = vmatpush1.msra.mxu0 0.0
    %980 = vmatprep.subr.mxu0 0.0
    %981 = vmatpush1.msra.mxu0 0.0
    %982 = vmatprep.subr.mxu0 0.0
    %983 = vmatpush1.msra.mxu0 0.0
    %984 = vmatprep.subr.mxu0 0.0
    %985 = vmatpush1.msra.mxu0 0.0
    %986 = vmatprep.subr.mxu0 0.0
    %987 = vmatpush1.msra.mxu0 0.0
    %988 = vmatprep.subr.mxu0 0.0
    %989 = vmatpush1.msra.mxu0 0.0
    %990 = vmatprep.subr.mxu0 0.0
    %991 = vmatpush1.msra.mxu0 0.0
    %992 = vmatprep.subr.mxu0 0.0
    %993 = vmatpush1.msra.mxu0 0.0
    %994 = vmatprep.subr.mxu0 0.0
    %995 = vmatpush1.msra.mxu0 0.0
    %996 = vmatprep.subr.mxu0 0.0
    %997 = vmatpush1.msra.mxu0 0.0
    %998 = vmatprep.subr.mxu0 0.0
    %999 = vmatpush1.msra.mxu0 0.0
    %1000 = vmatprep.subr.mxu0 0.0
    %1001 = vmatpush1.msra.mxu0 0.0
    %1002 = vmatprep.subr.mxu0 0.0
    %1003 = vmatpush1.msra.mxu0 0.0
    %1004 = vmatprep.subr.mxu0 0.0
    %1005 = vmatpush1.msra.mxu0 0.0
    %1006 = vmatprep.subr.mxu0 0.0
    %1007 = vmatpush1.msra.mxu0 0.0
    %1008 = vmatprep.subr.mxu0 0.0
    %1009 = vmatpush1.msra.mxu0 0.0
    %1010 = vmatprep.subr.mxu0 0.0
    %1011 = vmatpush1.msra.mxu0 0.0
    %1012 = vmatprep.subr.mxu0 0.0
    %1013 = vmatpush1.msra.mxu0 0.0
    %1014 = vmatprep.subr.mxu0 0.0
    %1015 = vmatpush1.msra.mxu0 0.0
    %1016 = vmatprep.mubr.f32.mxu0 0.0
    %v1017 = vand.u32 %v949, 4294901760
    %v1018 = vsub.f32 %v949, %v1017
    %v1019 = vand.u32 %v1018, 4294901760
    %v1020 = vsub.f32 %v1018, %v1019
    %v1021 = vand.u32 %v1020, 4294901760
    %1022 = vmatmul.mubr.f32.gmra.mrb[0].mxu0 %v1021
    %v1023 = vpop.f32.mrb[0].mxu0
    %v1024 = vadd.f32 0.0, %v1023
    %v1025 = vpop.f32.mrb[0].mxu0
    %1026 = vdwg.mxu0
    %1027 = vmatprep.subr.mxu0 0.0
    %v1028 = vand.u32 %v478, 4294901760
    %v1029 = vsub.f32 %v478, %v1028
    %v1030 = vand.u32 %v1029, 4294901760
    %v1031 = vsub.f32 %v1029, %v1030
    %v1032 = vand.u32 %v1031, 4294901760
    %1033 = vmatpush1.msra.mxu0 %v1032
    %1034 = vmatprep.subr.mxu0 0.0
    %1035 = vmatpush1.msra.mxu0 0.0
    %1036 = vmatprep.subr.mxu0 0.0
    %1037 = vmatpush1.msra.mxu0 0.0
    %1038 = vmatprep.subr.mxu0 0.0
    %1039 = vmatpush1.msra.mxu0 0.0
    %1040 = vmatprep.subr.mxu0 0.0
    %1041 = vmatpush1.msra.mxu0 0.0
    %1042 = vmatprep.subr.mxu0 0.0
    %1043 = vmatpush1.msra.mxu0 0.0
    %1044 = vmatprep.subr.mxu0 0.0
    %1045 = vmatpush1.msra.mxu0 0.0
    %1046 = vmatprep.subr.mxu0 0.0
    %1047 = vmatpush1.msra.mxu0 0.0
    %1048 = vmatprep.subr.mxu0 0.0
    %1049 = vmatpush1.msra.mxu0 0.0
    %1050 = vmatprep.subr.mxu0 0.0
    %1051 = vmatpush1.msra.mxu0 0.0
    %1052 = vmatprep.subr.mxu0 0.0
    %1053 = vmatpush1.msra.mxu0 0.0
    %1054 = vmatprep.subr.mxu0 0.0
    %1055 = vmatpush1.msra.mxu0 0.0
    %1056 = vmatprep.subr.mxu0 0.0
    %1057 = vmatpush1.msra.mxu0 0.0
    %1058 = vmatprep.subr.mxu0 0.0
    %1059 = vmatpush1.msra.mxu0 0.0
    %1060 = vmatprep.subr.mxu0 0.0
    %1061 = vmatpush1.msra.mxu0 0.0
    %1062 = vmatprep.subr.mxu0 0.0
    %1063 = vmatpush1.msra.mxu0 0.0
    %1064 = vmatprep.subr.mxu0 0.0
    %1065 = vmatpush1.msra.mxu0 0.0
    %1066 = vmatprep.subr.mxu0 0.0
    %1067 = vmatpush1.msra.mxu0 0.0
    %1068 = vmatprep.subr.mxu0 0.0
    %1069 = vmatpush1.msra.mxu0 0.0
    %1070 = vmatprep.subr.mxu0 0.0
    %1071 = vmatpush1.msra.mxu0 0.0
    %1072 = vmatprep.subr.mxu0 0.0
    %1073 = vmatpush1.msra.mxu0 0.0
    %1074 = vmatprep.subr.mxu0 0.0
    %1075 = vmatpush1.msra.mxu0 0.0
    %1076 = vmatprep.subr.mxu0 0.0
    %1077 = vmatpush1.msra.mxu0 0.0
    %1078 = vmatprep.subr.mxu0 0.0
    %1079 = vmatpush1.msra.mxu0 0.0
    %1080 = vmatprep.subr.mxu0 0.0
    %1081 = vmatpush1.msra.mxu0 0.0
    %1082 = vmatprep.subr.mxu0 0.0
    %1083 = vmatpush1.msra.mxu0 0.0
    %1084 = vmatprep.subr.mxu0 0.0
    %1085 = vmatpush1.msra.mxu0 0.0
    %1086 = vmatprep.subr.mxu0 0.0
    %1087 = vmatpush1.msra.mxu0 0.0
    %1088 = vmatprep.subr.mxu0 0.0
    %1089 = vmatpush1.msra.mxu0 0.0
    %1090 = vmatprep.subr.mxu0 0.0
    %1091 = vmatpush1.msra.mxu0 0.0
    %1092 = vmatprep.subr.mxu0 0.0
    %1093 = vmatpush1.msra.mxu0 0.0
    %1094 = vmatprep.subr.mxu0 0.0
    %1095 = vmatpush1.msra.mxu0 0.0
    %1096 = vmatprep.mubr.f32.mxu0 0.0
    %v1097 = vand.u32 %v949, 4294901760
    %1098 = vmatmul.mubr.f32.gmra.mrb[0].mxu0 %v1097
    %v1099 = vpop.f32.mrb[0].mxu0
    %v1100 = vadd.f32 %v1024, %v1099
    %v1101 = vpop.f32.mrb[0].mxu0
    %1102 = vdwg.mxu0
    %1103 = vmatprep.subr.mxu0 0.0
    %v1104 = vand.u32 %v478, 4294901760
    %v1105 = vsub.f32 %v478, %v1104
    %1106 = vmatpush1.msra.mxu0 %v1105
    %1107 = vmatprep.subr.mxu0 0.0
    %1108 = vmatpush1.msra.mxu0 0.0
    %1109 = vmatprep.subr.mxu0 0.0
    %1110 = vmatpush1.msra.mxu0 0.0
    %1111 = vmatprep.subr.mxu0 0.0
    %1112 = vmatpush1.msra.mxu0 0.0
    %1113 = vmatprep.subr.mxu0 0.0
    %1114 = vmatpush1.msra.mxu0 0.0
    %1115 = vmatprep.subr.mxu0 0.0
    %1116 = vmatpush1.msra.mxu0 0.0
    %1117 = vmatprep.subr.mxu0 0.0
    %1118 = vmatpush1.msra.mxu0 0.0
    %1119 = vmatprep.subr.mxu0 0.0
    %1120 = vmatpush1.msra.mxu0 0.0
    %1121 = vmatprep.subr.mxu0 0.0
    %1122 = vmatpush1.msra.mxu0 0.0
    %1123 = vmatprep.subr.mxu0 0.0
    %1124 = vmatpush1.msra.mxu0 0.0
    %1125 = vmatprep.subr.mxu0 0.0
    %1126 = vmatpush1.msra.mxu0 0.0
    %1127 = vmatprep.subr.mxu0 0.0
    %1128 = vmatpush1.msra.mxu0 0.0
    %1129 = vmatprep.subr.mxu0 0.0
    %1130 = vmatpush1.msra.mxu0 0.0
    %1131 = vmatprep.subr.mxu0 0.0
    %1132 = vmatpush1.msra.mxu0 0.0
    %1133 = vmatprep.subr.mxu0 0.0
    %1134 = vmatpush1.msra.mxu0 0.0
    %1135 = vmatprep.subr.mxu0 0.0
    %1136 = vmatpush1.msra.mxu0 0.0
    %1137 = vmatprep.subr.mxu0 0.0
    %1138 = vmatpush1.msra.mxu0 0.0
    %1139 = vmatprep.subr.mxu0 0.0
    %1140 = vmatpush1.msra.mxu0 0.0
    %1141 = vmatprep.subr.mxu0 0.0
    %1142 = vmatpush1.msra.mxu0 0.0
    %1143 = vmatprep.subr.mxu0 0.0
    %1144 = vmatpush1.msra.mxu0 0.0
    %1145 = vmatprep.subr.mxu0 0.0
    %1146 = vmatpush1.msra.mxu0 0.0
    %1147 = vmatprep.subr.mxu0 0.0
    %1148 = vmatpush1.msra.mxu0 0.0
    %1149 = vmatprep.subr.mxu0 0.0
    %1150 = vmatpush1.msra.mxu0 0.0
    %1151 = vmatprep.subr.mxu0 0.0
    %1152 = vmatpush1.msra.mxu0 0.0
    %1153 = vmatprep.subr.mxu0 0.0
    %1154 = vmatpush1.msra.mxu0 0.0
    %1155 = vmatprep.subr.mxu0 0.0
    %1156 = vmatpush1.msra.mxu0 0.0
    %1157 = vmatprep.subr.mxu0 0.0
    %1158 = vmatpush1.msra.mxu0 0.0
    %1159 = vmatprep.subr.mxu0 0.0
    %1160 = vmatpush1.msra.mxu0 0.0
    %1161 = vmatprep.subr.mxu0 0.0
    %1162 = vmatpush1.msra.mxu0 0.0
    %1163 = vmatprep.subr.mxu0 0.0
    %1164 = vmatpush1.msra.mxu0 0.0
    %1165 = vmatprep.subr.mxu0 0.0
    %1166 = vmatpush1.msra.mxu0 0.0
    %1167 = vmatprep.subr.mxu0 0.0
    %1168 = vmatpush1.msra.mxu0 0.0
    %1169 = vmatprep.mubr.f32.mxu0 0.0
    %v1170 = vand.u32 %v949, 4294901760
    %v1171 = vsub.f32 %v949, %v1170
    %1172 = vmatmul.mubr.f32.gmra.mrb[0].mxu0 %v1171
    %v1173 = vpop.f32.mrb[0].mxu0
    %v1174 = vadd.f32 %v1100, %v1173
    %v1175 = vpop.f32.mrb[0].mxu0
    %1176 = vdwg.mxu0
    %1177 = vmatprep.subr.mxu0 0.0
    %v1178 = vand.u32 %v478, 4294901760
    %1179 = vmatpush1.msra.mxu0 %v1178
    %1180 = vmatprep.subr.mxu0 0.0
    %1181 = vmatpush1.msra.mxu0 0.0
    %1182 = vmatprep.subr.mxu0 0.0
    %1183 = vmatpush1.msra.mxu0 0.0
    %1184 = vmatprep.subr.mxu0 0.0
    %1185 = vmatpush1.msra.mxu0 0.0
    %1186 = vmatprep.subr.mxu0 0.0
    %1187 = vmatpush1.msra.mxu0 0.0
    %1188 = vmatprep.subr.mxu0 0.0
    %1189 = vmatpush1.msra.mxu0 0.0
    %1190 = vmatprep.subr.mxu0 0.0
    %1191 = vmatpush1.msra.mxu0 0.0
    %1192 = vmatprep.subr.mxu0 0.0
    %1193 = vmatpush1.msra.mxu0 0.0
    %1194 = vmatprep.subr.mxu0 0.0
    %1195 = vmatpush1.msra.mxu0 0.0
    %1196 = vmatprep.subr.mxu0 0.0
    %1197 = vmatpush1.msra.mxu0 0.0
    %1198 = vmatprep.subr.mxu0 0.0
    %1199 = vmatpush1.msra.mxu0 0.0
    %1200 = vmatprep.subr.mxu0 0.0
    %1201 = vmatpush1.msra.mxu0 0.0
    %1202 = vmatprep.subr.mxu0 0.0
    %1203 = vmatpush1.msra.mxu0 0.0
    %1204 = vmatprep.subr.mxu0 0.0
    %1205 = vmatpush1.msra.mxu0 0.0
    %1206 = vmatprep.subr.mxu0 0.0
    %1207 = vmatpush1.msra.mxu0 0.0
    %1208 = vmatprep.subr.mxu0 0.0
    %1209 = vmatpush1.msra.mxu0 0.0
    %1210 = vmatprep.subr.mxu0 0.0
    %1211 = vmatpush1.msra.mxu0 0.0
    %1212 = vmatprep.subr.mxu0 0.0
    %1213 = vmatpush1.msra.mxu0 0.0
    %1214 = vmatprep.subr.mxu0 0.0
    %1215 = vmatpush1.msra.mxu0 0.0
    %1216 = vmatprep.subr.mxu0 0.0
    %1217 = vmatpush1.msra.mxu0 0.0
    %1218 = vmatprep.subr.mxu0 0.0
    %1219 = vmatpush1.msra.mxu0 0.0
    %1220 = vmatprep.subr.mxu0 0.0
    %1221 = vmatpush1.msra.mxu0 0.0
    %1222 = vmatprep.subr.mxu0 0.0
    %1223 = vmatpush1.msra.mxu0 0.0
    %1224 = vmatprep.subr.mxu0 0.0
    %1225 = vmatpush1.msra.mxu0 0.0
    %1226 = vmatprep.subr.mxu0 0.0
    %1227 = vmatpush1.msra.mxu0 0.0
    %1228 = vmatprep.subr.mxu0 0.0
    %1229 = vmatpush1.msra.mxu0 0.0
    %1230 = vmatprep.subr.mxu0 0.0
    %1231 = vmatpush1.msra.mxu0 0.0
    %1232 = vmatprep.subr.mxu0 0.0
    %1233 = vmatpush1.msra.mxu0 0.0
    %1234 = vmatprep.subr.mxu0 0.0
    %1235 = vmatpush1.msra.mxu0 0.0
    %1236 = vmatprep.subr.mxu0 0.0
    %1237 = vmatpush1.msra.mxu0 0.0
    %1238 = vmatprep.subr.mxu0 0.0
    %1239 = vmatpush1.msra.mxu0 0.0
    %1240 = vmatprep.subr.mxu0 0.0
    %1241 = vmatpush1.msra.mxu0 0.0
    %1242 = vmatprep.mubr.f32.mxu0 0.0
    %v1243 = vand.u32 %v949, 4294901760
    %v1244 = vsub.f32 %v949, %v1243
    %v1245 = vand.u32 %v1244, 4294901760
    %1246 = vmatmul.mubr.f32.gmra.mrb[0].mxu0 %v1245
    %v1247 = vpop.f32.mrb[0].mxu0
    %v1248 = vadd.f32 %v1174, %v1247
    %v1249 = vpop.f32.mrb[0].mxu0
    %1250 = vdwg.mxu0
    %1251 = vmatprep.subr.mxu0 0.0
    %v1252 = vand.u32 %v478, 4294901760
    %v1253 = vsub.f32 %v478, %v1252
    %v1254 = vand.u32 %v1253, 4294901760
    %1255 = vmatpush1.msra.mxu0 %v1254
    %1256 = vmatprep.subr.mxu0 0.0
    %1257 = vmatpush1.msra.mxu0 0.0
    %1258 = vmatprep.subr.mxu0 0.0
    %1259 = vmatpush1.msra.mxu0 0.0
    %1260 = vmatprep.subr.mxu0 0.0
    %1261 = vmatpush1.msra.mxu0 0.0
    %1262 = vmatprep.subr.mxu0 0.0
    %1263 = vmatpush1.msra.mxu0 0.0
    %1264 = vmatprep.subr.mxu0 0.0
    %1265 = vmatpush1.msra.mxu0 0.0
    %1266 = vmatprep.subr.mxu0 0.0
    %1267 = vmatpush1.msra.mxu0 0.0
    %1268 = vmatprep.subr.mxu0 0.0
    %1269 = vmatpush1.msra.mxu0 0.0
    %1270 = vmatprep.subr.mxu0 0.0
    %1271 = vmatpush1.msra.mxu0 0.0
    %1272 = vmatprep.subr.mxu0 0.0
    %1273 = vmatpush1.msra.mxu0 0.0
    %1274 = vmatprep.subr.mxu0 0.0
    %1275 = vmatpush1.msra.mxu0 0.0
    %1276 = vmatprep.subr.mxu0 0.0
    %1277 = vmatpush1.msra.mxu0 0.0
    %1278 = vmatprep.subr.mxu0 0.0
    %1279 = vmatpush1.msra.mxu0 0.0
    %1280 = vmatprep.subr.mxu0 0.0
    %1281 = vmatpush1.msra.mxu0 0.0
    %1282 = vmatprep.subr.mxu0 0.0
    %1283 = vmatpush1.msra.mxu0 0.0
    %1284 = vmatprep.subr.mxu0 0.0
    %1285 = vmatpush1.msra.mxu0 0.0
    %1286 = vmatprep.subr.mxu0 0.0
    %1287 = vmatpush1.msra.mxu0 0.0
    %1288 = vmatprep.subr.mxu0 0.0
    %1289 = vmatpush1.msra.mxu0 0.0
    %1290 = vmatprep.subr.mxu0 0.0
    %1291 = vmatpush1.msra.mxu0 0.0
    %1292 = vmatprep.subr.mxu0 0.0
    %1293 = vmatpush1.msra.mxu0 0.0
    %1294 = vmatprep.subr.mxu0 0.0
    %1295 = vmatpush1.msra.mxu0 0.0
    %1296 = vmatprep.subr.mxu0 0.0
    %1297 = vmatpush1.msra.mxu0 0.0
    %1298 = vmatprep.subr.mxu0 0.0
    %1299 = vmatpush1.msra.mxu0 0.0
    %1300 = vmatprep.subr.mxu0 0.0
    %1301 = vmatpush1.msra.mxu0 0.0
    %1302 = vmatprep.subr.mxu0 0.0
    %1303 = vmatpush1.msra.mxu0 0.0
    %1304 = vmatprep.subr.mxu0 0.0
    %1305 = vmatpush1.msra.mxu0 0.0
    %1306 = vmatprep.subr.mxu0 0.0
    %1307 = vmatpush1.msra.mxu0 0.0
    %1308 = vmatprep.subr.mxu0 0.0
    %1309 = vmatpush1.msra.mxu0 0.0
    %1310 = vmatprep.subr.mxu0 0.0
    %1311 = vmatpush1.msra.mxu0 0.0
    %1312 = vmatprep.subr.mxu0 0.0
    %1313 = vmatpush1.msra.mxu0 0.0
    %1314 = vmatprep.subr.mxu0 0.0
    %1315 = vmatpush1.msra.mxu0 0.0
    %1316 = vmatprep.subr.mxu0 0.0
    %1317 = vmatpush1.msra.mxu0 0.0
    %1318 = vmatprep.mubr.f32.mxu0 0.0
    %v1319 = vand.u32 %v949, 4294901760
    %1320 = vmatmul.mubr.f32.gmra.mrb[0].mxu0 %v1319
    %v1321 = vpop.f32.mrb[0].mxu0
    %v1322 = vadd.f32 %v1248, %v1321
    %v1323 = vpop.f32.mrb[0].mxu0
    %1324 = vdwg.mxu0
    %1325 = vmatprep.subr.mxu0 0.0
    %v1326 = vand.u32 %v478, 4294901760
    %1327 = vmatpush1.msra.mxu0 %v1326
    %1328 = vmatprep.subr.mxu0 0.0
    %1329 = vmatpush1.msra.mxu0 0.0
    %1330 = vmatprep.subr.mxu0 0.0
    %1331 = vmatpush1.msra.mxu0 0.0
    %1332 = vmatprep.subr.mxu0 0.0
    %1333 = vmatpush1.msra.mxu0 0.0
    %1334 = vmatprep.subr.mxu0 0.0
    %1335 = vmatpush1.msra.mxu0 0.0
    %1336 = vmatprep.subr.mxu0 0.0
    %1337 = vmatpush1.msra.mxu0 0.0
    %1338 = vmatprep.subr.mxu0 0.0
    %1339 = vmatpush1.msra.mxu0 0.0
    %1340 = vmatprep.subr.mxu0 0.0
    %1341 = vmatpush1.msra.mxu0 0.0
    %1342 = vmatprep.subr.mxu0 0.0
    %1343 = vmatpush1.msra.mxu0 0.0
    %1344 = vmatprep.subr.mxu0 0.0
    %1345 = vmatpush1.msra.mxu0 0.0
    %1346 = vmatprep.subr.mxu0 0.0
    %1347 = vmatpush1.msra.mxu0 0.0
    %1348 = vmatprep.subr.mxu0 0.0
    %1349 = vmatpush1.msra.mxu0 0.0
    %1350 = vmatprep.subr.mxu0 0.0
    %1351 = vmatpush1.msra.mxu0 0.0
    %1352 = vmatprep.subr.mxu0 0.0
    %1353 = vmatpush1.msra.mxu0 0.0
    %1354 = vmatprep.subr.mxu0 0.0
    %1355 = vmatpush1.msra.mxu0 0.0
    %1356 = vmatprep.subr.mxu0 0.0
    %1357 = vmatpush1.msra.mxu0 0.0
    %1358 = vmatprep.subr.mxu0 0.0
    %1359 = vmatpush1.msra.mxu0 0.0
    %1360 = vmatprep.subr.mxu0 0.0
    %1361 = vmatpush1.msra.mxu0 0.0
    %1362 = vmatprep.subr.mxu0 0.0
    %1363 = vmatpush1.msra.mxu0 0.0
    %1364 = vmatprep.subr.mxu0 0.0
    %1365 = vmatpush1.msra.mxu0 0.0
    %1366 = vmatprep.subr.mxu0 0.0
    %1367 = vmatpush1.msra.mxu0 0.0
    %1368 = vmatprep.subr.mxu0 0.0
    %1369 = vmatpush1.msra.mxu0 0.0
    %1370 = vmatprep.subr.mxu0 0.0
    %1371 = vmatpush1.msra.mxu0 0.0
    %1372 = vmatprep.subr.mxu0 0.0
    %1373 = vmatpush1.msra.mxu0 0.0
    %1374 = vmatprep.subr.mxu0 0.0
    %1375 = vmatpush1.msra.mxu0 0.0
    %1376 = vmatprep.subr.mxu0 0.0
    %1377 = vmatpush1.msra.mxu0 0.0
    %1378 = vmatprep.subr.mxu0 0.0
    %1379 = vmatpush1.msra.mxu0 0.0
    %1380 = vmatprep.subr.mxu0 0.0
    %1381 = vmatpush1.msra.mxu0 0.0
    %1382 = vmatprep.subr.mxu0 0.0
    %1383 = vmatpush1.msra.mxu0 0.0
    %1384 = vmatprep.subr.mxu0 0.0
    %1385 = vmatpush1.msra.mxu0 0.0
    %1386 = vmatprep.subr.mxu0 0.0
    %1387 = vmatpush1.msra.mxu0 0.0
    %1388 = vmatprep.subr.mxu0 0.0
    %1389 = vmatpush1.msra.mxu0 0.0
    %1390 = vmatprep.mubr.f32.mxu0 0.0
    %v1391 = vand.u32 %v949, 4294901760
    %1392 = vmatmul.mubr.f32.gmra.mrb[0].mxu0 %v1391
    %v1393 = vpop.f32.mrb[0].mxu0
    %v1394 = vadd.f32 %v1322, %v1393
    %v1395 = vpop.f32.mrb[0].mxu0
    %1396 = vdwg.mxu0
    %v1397 = vmul.f32 %v478, %v1394
    %vm1398 = vcmask 7168
    %v1399 = vsel %vm1398, %v1397, 0.0
    %1400 = vadd.xlane.f32.xlu0 %v1399
    %v1401 = vpop.xlane.xlu0 %1400
    %v1402 = vrot.slane %v1401, 4
    %v1403 = vadd.f32 %v1401, %v1402
    %v1404 = vrot.slane %v1403, 2
    %v1405 = vadd.f32 %v1403, %v1404
    %v1406 = vrot.slane %v1405, 1
    %v1407 = vadd.f32 %v1405, %v1406
    %s1408 = vtos %v1407
    %s1409 = smax.f32 %s1408, 0.0
    %v1410 = vstv %s1409
    %v1411 = vrsqrt.pop %v1410
    %v1412 = vmul.f32 %v1410, %v1411
    %vm1413 = vcmp.eq.f32.partialorder %v1410, inf
    %v1414 = vsel %vm1413, %v1410, %v1412
    %vm1415 = vcmp.eq.f32.partialorder %v1410, 0.0
    %v1416 = vand.u32 %v1410, 2147483648
    %v1417 = vsel %vm1415, %v1416, %v1414
    %s1418 = vtos %v1417
    %s1419 = smax.f32 %s1418, 1.0
    %v1420 = vstv %s1419
    %v1421 = vrcp.pop %v1420
    %s1422 = vtos %v1421
    %v1423 = vstv %s1422
    %v1424 = vmul.f32 %v21, %v1423
    %1425 = vst.msk [vmem:[#allocation5] sm:$0xff] %vm22, %v1424
    // Predicated region
    $region17: #{tpu_custom_call.1} parent=1 // pred_check
      _
    $region18: #{tpu_custom_call.1} parent=1 // pred_check_branch
      %1427 = sbr.rel (0) target = $region20
    $region19: #{tpu_custom_call.1} parent=1 // pred_region
      %s1429 = ssub.s32 128, 128
      %1430 = vsyncadd [#allocation4], %s1429
      %s1432 = sshll.u32 [#allocation5], 4
      %s1433 = int_to_ptr.vmem [resolvable:$true] %s1432
      %1435 = dma.vmem_to_hbm [thread:$0]  %s1433, 128, %s1, [#allocation4]
    $region20: #{tpu_custom_call.1} parent=1 // pred_fallthru
      _
    // Predicated region
    $region21: #{tpu_custom_call.1} parent=1 // pred_check
      _
    $region22: #{tpu_custom_call.1} parent=1 // pred_check_branch
      %1437 = sbr.rel (0) target = $region24
    $region23: #{tpu_custom_call.1} parent=1 // pred_region
      %1438 = dma.done [#allocation4], 128
    $region24: #{tpu_custom_call.1} parent=1 // pred_fallthru
      _
    %1439 = vsyncpa [#allocation3], 1
    %1440 = vsyncpa [#allocation4], 1

</llo_original>
